<compile_context>
chip_gen: v7x
topology: tpu7x:2x2x1
jax: 0.10.0
libtpu: 0.0.40
codegen_flags: <defaults>
</compile_context>

<pallas_src>
import jax
import jax.numpy as jnp
from jax.experimental import pallas as pl
from jax.experimental.pallas import tpu as pltpu

BN_EPS = 1e-5
NEG_SLOPE = 0.1
HIDDEN = 1000           # nn.Linear(input_size, 1000)
HPAD = 1024             # padded hidden width (8 * 128)
ZDIM = 32               # nn.Linear(1000, 32), hardcoded in the module
ZPAD = 128              # fused + padded output width: [mu(32) | log_var(32) | zeros]

_TK_CAP = 4096                 # double-buffered bf16 W1 tile: 2*4096*1024*2 B = 16 MiB
_STEP_OVERHEAD_BYTES = 350_000  # ~0.35 us per grid step at ~1 TB/s HBM, in byte-equivalents


def _round_up(n, m):
    return ((n + m - 1) // m) * m


def _padded_din_and_tile(d_in):
    """Pick (padded D_in, K tile) minimizing shipped W1 bytes + per-step overhead.

    Candidates are 128-aligned tiles <= _TK_CAP so the double-buffered bf16 W1
    tile stays <= 16 MiB (fits the v7x 32 MiB scoped-VMEM cap with room for the
    x buffers, the f32 accumulator and W2).  Exact divisors of the 128-aligned
    D_in are naturally preferred since they ship no zero-padded rows.
    """
    d_pad0 = _round_up(d_in, 128)
    tk_cap = min(d_pad0, _TK_CAP)
    best = None
    for tk in range(128, tk_cap + 1, 128):
        steps = pl.cdiv(d_pad0, tk)
        padded = steps * tk
        cost = padded * HPAD * 2 + steps * _STEP_OVERHEAD_BYTES
        if best is None or cost < best[0]:
            best = (cost, tk, padded)
    _, tk, d_pad = best
    return d_pad, tk


def _bn_lrelu(h, gamma, beta):
    """BatchNorm1d (training mode, biased batch var, two-pass) + LeakyReLU(0.1).

    All math in f32. h: (B, F); gamma/beta: (1, F).
    """
    inv_n = 1.0 / h.shape[0]
    mean = jnp.sum(h, axis=0, keepdims=True) * inv_n
    c = h - mean
    var = jnp.sum(c * c, axis=0, keepdims=True) * inv_n
    y = c * jax.lax.rsqrt(var + BN_EPS) * gamma + beta
    return jnp.where(y > 0, y, NEG_SLOPE * y)


def encoder_kernel(x_ref, w1_ref, g1_ref, be1_ref, w2_ref, g2_ref, be2_ref,
                   out_ref, acc_ref):
    k = pl.program_id(0)

    @pl.when(k == 0)
    def _():
        acc_ref[...] = jnp.zeros_like(acc_ref)

    # First Linear, K-tiled: acc += x[:, k-tile] @ W1[k-tile, :]   (bf16 -> f32)
    acc_ref[...] += jnp.dot(x_ref[...], w1_ref[...],
                            preferred_element_type=jnp.float32)

    @pl.when(k == pl.num_programs(0) - 1)
    def _():
        # Block 1 epilogue (no bias: canceled by training-mode BN mean subtraction).
        h = _bn_lrelu(acc_ref[...], g1_ref[...], be1_ref[...])

        # Fused mu/log_var branch: one (B,1024) x (1024,128) matmul + one epilogue.
        h2 = jnp.dot(h.astype(jnp.bfloat16), w2_ref[...],
                     preferred_element_type=jnp.float32)
        out_ref[...] = _bn_lrelu(h2, g2_ref[...], be2_ref[...])


def encoder_forward(x, packed_params):
    """x: (B, D_in) f32. packed_params: output of pack_params(). Returns (mu, log_var)."""
    w1, g1, be1, w2, g2, be2 = packed_params
    B, d_in = x.shape
    d_pad, tk = _padded_din_and_tile(d_in)
    assert w1.shape == (d_pad, HPAD)
    assert d_pad % tk == 0
    kt = d_pad // tk

    # Cast before padding so the padded copy is half the bytes (bf16).
    x = x.astype(jnp.bfloat16)
    if d_pad != d_in:
        x = jnp.pad(x, ((0, 0), (0, d_pad - d_in)))

    out = pl.pallas_call(
        encoder_kernel,
        out_shape=jax.ShapeDtypeStruct((B, ZPAD), jnp.float32),
        grid_spec=pltpu.PrefetchScalarGridSpec(
            num_scalar_prefetch=0,
            grid=(kt,),
            in_specs=[
                pl.BlockSpec((B, tk), lambda k: (0, k)),        # x tile
                pl.BlockSpec((tk, HPAD), lambda k: (k, 0)),     # W1 tile (pipelined)
                pl.BlockSpec((1, HPAD), lambda k: (0, 0)),      # gamma1 (grid-invariant)
                pl.BlockSpec((1, HPAD), lambda k: (0, 0)),      # beta1
                pl.BlockSpec((HPAD, ZPAD), lambda k: (0, 0)),   # fused W2
                pl.BlockSpec((1, ZPAD), lambda k: (0, 0)),      # gamma2
                pl.BlockSpec((1, ZPAD), lambda k: (0, 0)),      # beta2
            ],
            out_specs=pl.BlockSpec((B, ZPAD), lambda k: (0, 0)),
            scratch_shapes=[pltpu.VMEM((B, HPAD), jnp.float32)],  # h accumulator
        ),
        compiler_params=pltpu.CompilerParams(
            dimension_semantics=("arbitrary",),            # K axis is a reduction
            vmem_limit_bytes=32 * 1024 * 1024,             # explicit: v5e default is 16 MiB
        ),
    )(x, w1, g1, be1, w2, g2, be2)

    mu = out[:, :ZDIM]
    log_var = out[:, ZDIM:2 * ZDIM]
    return mu, log_var


def init_params(key, input_size):
    """PyTorch-equivalent parameters (Linear weights stored transposed: (fan_in, fan_out))."""
    ks = jax.random.split(key, 6)

    def linear_block_params(kw, kb, d_in, d_out):
        scale = 1.0 / jnp.sqrt(d_in)
        w_t = jax.random.uniform(kw, (d_in, d_out), jnp.float32, -scale, scale)
        b = jax.random.uniform(kb, (d_out,), jnp.float32, -scale, scale)
        gamma = jnp.ones((d_out,), jnp.float32)   # BatchNorm1d weight init
        beta = jnp.zeros((d_out,), jnp.float32)   # BatchNorm1d bias init
        return (w_t, b, gamma, beta)

    p1 = linear_block_params(ks[0], ks[1], input_size, HIDDEN)
    pm = linear_block_params(ks[2], ks[3], HIDDEN, ZDIM)
    pv = linear_block_params(ks[4], ks[5], HIDDEN, ZDIM)
    return (p1, pm, pv)


def pack_params(raw_params, input_size):
    """Pad HIDDEN -> 1024, fuse mu/log_var into one 128-wide block, cast weights to bf16.

    Linear biases are dropped: under training-mode BatchNorm they are exactly
    canceled by the batch-mean subtraction.  Padded features stay exact zeros
    (zero W1 rows/cols, gamma=beta=0 for padded features, zero W2 rows/cols).
    """
    (w1, _b1, g1, be1), (wm, _bm, gm, bem), (wv, _bv, gv, bev) = raw_params
    d_pad, _ = _padded_din_and_tile(input_size)

    w1p = jnp.zeros((d_pad, HPAD), jnp.float32).at[:input_size, :HIDDEN].set(w1)

    def pad_vec(v, n, width):
        return jnp.zeros((1, width), jnp.float32).at[0, :n].set(v)

    g1p, be1p = (pad_vec(v, HIDDEN, HPAD) for v in (g1, be1))

    # Fused second layer: [W_mu | W_var] -> (1024, 128); padded rows/cols are zero.
    w2 = (jnp.zeros((HPAD, ZPAD), jnp.float32)
          .at[:HIDDEN, :ZDIM].set(wm)
          .at[:HIDDEN, ZDIM:2 * ZDIM].set(wv))

    def fuse_vec(a, b):
        return (jnp.zeros((1, ZPAD), jnp.float32)
                .at[0, :ZDIM].set(a)
                .at[0, ZDIM:2 * ZDIM].set(b))

    g2, be2 = fuse_vec(gm, gv), fuse_vec(bem, bev)

    return (w1p.astype(jnp.bfloat16), g1p, be1p,
            w2.astype(jnp.bfloat16), g2, be2)


def encoder_reference(x, raw_params):
    """Pure-JAX reference with biases (same bf16-weight / f32-accumulate policy)."""
    def block(h_in, w, b, g, be):
        h = jnp.dot(h_in.astype(jnp.bfloat16), w.astype(jnp.bfloat16),
                    preferred_element_type=jnp.float32) + b[None, :]
        mean = jnp.mean(h, axis=0, keepdims=True)
        var = jnp.mean((h - mean) ** 2, axis=0, keepdims=True)
        y = (h - mean) * jax.lax.rsqrt(var + BN_EPS) * g[None, :] + be[None, :]
        return jnp.where(y > 0, y, NEG_SLOPE * y)

    p1, pm, pv = raw_params
    h = block(x, *p1)
    return block(h, *pm), block(h, *pv)


if __name__ == "__main__":
    key = jax.random.PRNGKey(0)
    k_x, k_p = jax.random.split(key)

    batch = 8          # multiple of 8 (one sublane group)
    input_size = 64    # small demo shape; real Tybalt uses ~5000 genes

    x = jax.random.normal(k_x, (batch, input_size), dtype=jnp.float32)
    raw = init_params(k_p, input_size)
    packed = pack_params(raw, input_size)

    mu, log_var = jax.jit(encoder_forward)(x, packed)
    jax.block_until_ready((mu, log_var))

    assert mu.shape == (batch, ZDIM) and log_var.shape == (batch, ZDIM)
    assert mu.dtype == jnp.float32 and log_var.dtype == jnp.float32
    assert bool(jnp.all(jnp.isfinite(mu))) and bool(jnp.all(jnp.isfinite(log_var)))

    mu_ref, lv_ref = encoder_reference(x, raw)
    assert bool(jnp.allclose(mu, mu_ref, rtol=1e-2, atol=1e-2))
    assert bool(jnp.allclose(log_var, lv_ref, rtol=1e-2, atol=1e-2))

    print("KERNEL_OK")
</pallas_src>

<mosaic_0001>
module attributes {stable_mosaic.version = 11 : i64} {
  func.func @encoder_kernel(%arg0: i32, %arg1: memref<8x128xbf16, #tpu.memory_space<vmem>>, %arg2: memref<128x1024xbf16, #tpu.memory_space<vmem>>, %arg3: memref<1x1024xf32, #tpu.memory_space<vmem>>, %arg4: memref<1x1024xf32, #tpu.memory_space<vmem>>, %arg5: memref<1024x128xbf16, #tpu.memory_space<vmem>>, %arg6: memref<1x128xf32, #tpu.memory_space<vmem>>, %arg7: memref<1x128xf32, #tpu.memory_space<vmem>>, %arg8: memref<8x128xf32, #tpu.memory_space<vmem>>, %arg9: memref<8x1024xf32, #tpu.memory_space<vmem>>) attributes {dimension_semantics = [#tpu.dimension_semantics<arbitrary>], iteration_bounds = array<i64: 1>, scalar_prefetch = 0 : i64, scratch_operands = 1 : i64, tpu.core_type = #tpu.core_type<tc>, window_params = [{transform_indices = @transform_0, window_bounds = array<i64: 8, 128>}, {transform_indices = @transform_1, window_bounds = array<i64: 128, 1024>}, {pipeline_mode = #tpu.pipeline_mode<synchronous>, transform_indices = @transform_2, window_bounds = array<i64: 1, 1024>}, {pipeline_mode = #tpu.pipeline_mode<synchronous>, transform_indices = @transform_3, window_bounds = array<i64: 1, 1024>}, {pipeline_mode = #tpu.pipeline_mode<synchronous>, transform_indices = @transform_4, window_bounds = array<i64: 1024, 128>}, {pipeline_mode = #tpu.pipeline_mode<synchronous>, transform_indices = @transform_5, window_bounds = array<i64: 1, 128>}, {pipeline_mode = #tpu.pipeline_mode<synchronous>, transform_indices = @transform_6, window_bounds = array<i64: 1, 128>}, {pipeline_mode = #tpu.pipeline_mode<synchronous>, transform_indices = @transform_7, window_bounds = array<i64: 8, 128>}]} {
    %c0_i32 = arith.constant 0 : i32
    %0 = arith.cmpi eq, %arg0, %c0_i32 : i32
    %1 = arith.extui %0 : i1 to i32
    %c0_i32_0 = arith.constant 0 : i32
    %2 = arith.cmpi ne, %1, %c0_i32_0 : i32
    scf.if %2 {
      %cst_10 = arith.constant 0.000000e+00 : f32
      %12 = vector.broadcast %cst_10 : f32 to vector<8x1024xf32>
      %c0_11 = arith.constant 0 : index
      %c0_12 = arith.constant 0 : index
      %13 = vector.load %arg9[%c0_11, %c0_12] : memref<8x1024xf32, #tpu.memory_space<vmem>>, vector<8x1024xf32>
      tpu.vector_store %arg9[%c0_11, %c0_12], %12 {strides = array<i32>} : memref<8x1024xf32, #tpu.memory_space<vmem>>, vector<8x1024xf32>,
    } else {
    }
    %c0 = arith.constant 0 : index
    %c0_1 = arith.constant 0 : index
    %3 = vector.load %arg9[%c0, %c0_1] : memref<8x1024xf32, #tpu.memory_space<vmem>>, vector<8x1024xf32>
    %c0_2 = arith.constant 0 : index
    %c0_3 = arith.constant 0 : index
    %4 = vector.load %arg1[%c0_2, %c0_3] : memref<8x128xbf16, #tpu.memory_space<vmem>>, vector<8x128xbf16>
    %c0_4 = arith.constant 0 : index
    %c0_5 = arith.constant 0 : index
    %5 = vector.load %arg2[%c0_4, %c0_5] : memref<128x1024xbf16, #tpu.memory_space<vmem>>, vector<128x1024xbf16>
    %cst = arith.constant dense<0.000000e+00> : vector<8x1024xf32>
    %6 = tpu.matmul %4, %5, %cst {dimension_numbers = #tpu.dot_dimension_numbers<[1], [0], [0], [1], [0, 0, 1, 1], [], []>} : vector<8x128xbf16>, vector<128x1024xbf16>, vector<8x1024xf32> -> vector<8x1024xf32>
    %7 = arith.addf %3, %6 : vector<8x1024xf32>
    %c0_6 = arith.constant 0 : index
    %c0_7 = arith.constant 0 : index
    %8 = vector.load %arg9[%c0_6, %c0_7] : memref<8x1024xf32, #tpu.memory_space<vmem>>, vector<8x1024xf32>
    tpu.vector_store %arg9[%c0_6, %c0_7], %7 {strides = array<i32>} : memref<8x1024xf32, #tpu.memory_space<vmem>>, vector<8x1024xf32>,
    %c0_i32_8 = arith.constant 0 : i32
    %9 = arith.cmpi eq, %arg0, %c0_i32_8 : i32
    %10 = arith.extui %9 : i1 to i32
    %c0_i32_9 = arith.constant 0 : i32
    %11 = arith.cmpi ne, %10, %c0_i32_9 : i32
    scf.if %11 {
      %c0_10 = arith.constant 0 : index
      %c0_11 = arith.constant 0 : index
      %12 = vector.load %arg9[%c0_10, %c0_11] : memref<8x1024xf32, #tpu.memory_space<vmem>>, vector<8x1024xf32>
      %c0_12 = arith.constant 0 : index
      %c0_13 = arith.constant 0 : index
      %13 = vector.load %arg3[%c0_12, %c0_13] : memref<1x1024xf32, #tpu.memory_space<vmem>>, vector<1x1024xf32>
      %c0_14 = arith.constant 0 : index
      %c0_15 = arith.constant 0 : index
      %14 = vector.load %arg4[%c0_14, %c0_15] : memref<1x1024xf32, #tpu.memory_space<vmem>>, vector<1x1024xf32>
      %cst_16 = arith.constant dense<0.000000e+00> : vector<1024xf32>
      %15 = vector.multi_reduction <add>, %12, %cst_16 [0] : vector<8x1024xf32> to vector<1024xf32>
      %16 = vector.shape_cast %15 : vector<1024xf32> to vector<1x1024xf32>
      %cst_17 = arith.constant 1.250000e-01 : f32
      %17 = vector.broadcast %cst_17 : f32 to vector<1x1024xf32>
      %18 = arith.mulf %16, %17 : vector<1x1024xf32>
      %19 = vector.broadcast %18 : vector<1x1024xf32> to vector<8x1024xf32>
      %20 = arith.subf %12, %19 : vector<8x1024xf32>
      %21 = arith.mulf %20, %20 : vector<8x1024xf32>
      %cst_18 = arith.constant dense<0.000000e+00> : vector<1024xf32>
      %22 = vector.multi_reduction <add>, %21, %cst_18 [0] : vector<8x1024xf32> to vector<1024xf32>
      %23 = vector.shape_cast %22 : vector<1024xf32> to vector<1x1024xf32>
      %cst_19 = arith.constant 1.250000e-01 : f32
      %24 = vector.broadcast %cst_19 : f32 to vector<1x1024xf32>
      %25 = arith.mulf %23, %24 : vector<1x1024xf32>
      %cst_20 = arith.constant 9.99999974E-6 : f32
      %26 = vector.broadcast %cst_20 : f32 to vector<1x1024xf32>
      %27 = arith.addf %25, %26 : vector<1x1024xf32>
      %28 = math.rsqrt %27 : vector<1x1024xf32>
      %29 = vector.broadcast %28 : vector<1x1024xf32> to vector<8x1024xf32>
      %30 = arith.mulf %20, %29 : vector<8x1024xf32>
      %31 = vector.broadcast %13 : vector<1x1024xf32> to vector<8x1024xf32>
      %32 = arith.mulf %30, %31 : vector<8x1024xf32>
      %33 = vector.broadcast %14 : vector<1x1024xf32> to vector<8x1024xf32>
      %34 = arith.addf %32, %33 : vector<8x1024xf32>
      %cst_21 = arith.constant 0.000000e+00 : f32
      %35 = vector.broadcast %cst_21 : f32 to vector<8x1024xf32>
      %36 = arith.cmpf ogt, %34, %35 : vector<8x1024xf32>
      %cst_22 = arith.constant 1.000000e-01 : f32
      %37 = vector.broadcast %cst_22 : f32 to vector<8x1024xf32>
      %38 = arith.mulf %37, %34 : vector<8x1024xf32>
      %39 = arith.select %36, %34, %38 : vector<8x1024xi1>, vector<8x1024xf32>
      %40 = arith.truncf %39 : vector<8x1024xf32> to vector<8x1024xbf16>
      %c0_23 = arith.constant 0 : index
      %c0_24 = arith.constant 0 : index
      %41 = vector.load %arg5[%c0_23, %c0_24] : memref<1024x128xbf16, #tpu.memory_space<vmem>>, vector<1024x128xbf16>
      %cst_25 = arith.constant dense<0.000000e+00> : vector<8x128xf32>
      %42 = tpu.matmul %40, %41, %cst_25 {dimension_numbers = #tpu.dot_dimension_numbers<[1], [0], [0], [1], [0, 0, 1, 1], [], []>} : vector<8x1024xbf16>, vector<1024x128xbf16>, vector<8x128xf32> -> vector<8x128xf32>
      %c0_26 = arith.constant 0 : index
      %c0_27 = arith.constant 0 : index
      %43 = vector.load %arg6[%c0_26, %c0_27] : memref<1x128xf32, #tpu.memory_space<vmem>>, vector<1x128xf32>
      %c0_28 = arith.constant 0 : index
      %c0_29 = arith.constant 0 : index
      %44 = vector.load %arg7[%c0_28, %c0_29] : memref<1x128xf32, #tpu.memory_space<vmem>>, vector<1x128xf32>
      %cst_30 = arith.constant dense<0.000000e+00> : vector<128xf32>
      %45 = vector.multi_reduction <add>, %42, %cst_30 [0] : vector<8x128xf32> to vector<128xf32>
      %46 = vector.shape_cast %45 : vector<128xf32> to vector<1x128xf32>
      %cst_31 = arith.constant 1.250000e-01 : f32
      %47 = vector.broadcast %cst_31 : f32 to vector<1x128xf32>
      %48 = arith.mulf %46, %47 : vector<1x128xf32>
      %49 = vector.broadcast %48 : vector<1x128xf32> to vector<8x128xf32>
      %50 = arith.subf %42, %49 : vector<8x128xf32>
      %51 = arith.mulf %50, %50 : vector<8x128xf32>
      %cst_32 = arith.constant dense<0.000000e+00> : vector<128xf32>
      %52 = vector.multi_reduction <add>, %51, %cst_32 [0] : vector<8x128xf32> to vector<128xf32>
      %53 = vector.shape_cast %52 : vector<128xf32> to vector<1x128xf32>
      %cst_33 = arith.constant 1.250000e-01 : f32
      %54 = vector.broadcast %cst_33 : f32 to vector<1x128xf32>
      %55 = arith.mulf %53, %54 : vector<1x128xf32>
      %cst_34 = arith.constant 9.99999974E-6 : f32
      %56 = vector.broadcast %cst_34 : f32 to vector<1x128xf32>
      %57 = arith.addf %55, %56 : vector<1x128xf32>
      %58 = math.rsqrt %57 : vector<1x128xf32>
      %59 = vector.broadcast %58 : vector<1x128xf32> to vector<8x128xf32>
      %60 = arith.mulf %50, %59 : vector<8x128xf32>
      %61 = vector.broadcast %43 : vector<1x128xf32> to vector<8x128xf32>
      %62 = arith.mulf %60, %61 : vector<8x128xf32>
      %63 = vector.broadcast %44 : vector<1x128xf32> to vector<8x128xf32>
      %64 = arith.addf %62, %63 : vector<8x128xf32>
      %cst_35 = arith.constant 0.000000e+00 : f32
      %65 = vector.broadcast %cst_35 : f32 to vector<8x128xf32>
      %66 = arith.cmpf ogt, %64, %65 : vector<8x128xf32>
      %cst_36 = arith.constant 1.000000e-01 : f32
      %67 = vector.broadcast %cst_36 : f32 to vector<8x128xf32>
      %68 = arith.mulf %67, %64 : vector<8x128xf32>
      %69 = arith.select %66, %64, %68 : vector<8x128xi1>, vector<8x128xf32>
      %c0_37 = arith.constant 0 : index
      %c0_38 = arith.constant 0 : index
      %70 = vector.load %arg8[%c0_37, %c0_38] : memref<8x128xf32, #tpu.memory_space<vmem>>, vector<8x128xf32>
      tpu.vector_store %arg8[%c0_37, %c0_38], %69 {strides = array<i32>} : memref<8x128xf32, #tpu.memory_space<vmem>>, vector<8x128xf32>,
    } else {
    }
    return
  }
  func.func @transform_0(%arg0: i32) -> (i32, i32) {
    %c0_i32 = arith.constant 0 : i32
    %c0_i32_0 = arith.constant 0 : i32
    return %c0_i32, %arg0 : i32, i32
  }
  func.func @transform_1(%arg0: i32) -> (i32, i32) {
    %c0_i32 = arith.constant 0 : i32
    %c0_i32_0 = arith.constant 0 : i32
    return %arg0, %c0_i32 : i32, i32
  }
  func.func @transform_2(%arg0: i32) -> (i32, i32) {
    %c0_i32 = arith.constant 0 : i32
    %c0_i32_0 = arith.constant 0 : i32
    %c0_i32_1 = arith.constant 0 : i32
    return %c0_i32, %c0_i32_0 : i32, i32
  }
  func.func @transform_3(%arg0: i32) -> (i32, i32) {
    %c0_i32 = arith.constant 0 : i32
    %c0_i32_0 = arith.constant 0 : i32
    %c0_i32_1 = arith.constant 0 : i32
    return %c0_i32, %c0_i32_0 : i32, i32
  }
  func.func @transform_4(%arg0: i32) -> (i32, i32) {
    %c0_i32 = arith.constant 0 : i32
    %c0_i32_0 = arith.constant 0 : i32
    %c0_i32_1 = arith.constant 0 : i32
    return %c0_i32, %c0_i32_0 : i32, i32
  }
  func.func @transform_5(%arg0: i32) -> (i32, i32) {
    %c0_i32 = arith.constant 0 : i32
    %c0_i32_0 = arith.constant 0 : i32
    %c0_i32_1 = arith.constant 0 : i32
    return %c0_i32, %c0_i32_0 : i32, i32
  }
  func.func @transform_6(%arg0: i32) -> (i32, i32) {
    %c0_i32 = arith.constant 0 : i32
    %c0_i32_0 = arith.constant 0 : i32
    %c0_i32_1 = arith.constant 0 : i32
    return %c0_i32, %c0_i32_0 : i32, i32
  }
  func.func @transform_7(%arg0: i32) -> (i32, i32) {
    %c0_i32 = arith.constant 0 : i32
    %c0_i32_0 = arith.constant 0 : i32
    %c0_i32_1 = arith.constant 0 : i32
    return %c0_i32, %c0_i32_0 : i32, i32
  }
}

</mosaic_0001>

<llo_original>
// kernel: encoder_forward.1
$region0: #{encoder_forward.1}
  #allocation0 [shape = 'u32[]', space=smem, size = 0x4, offset = 0x4, fixed_abs, tag = 'smem constant byte address 0x4 - core index']
  #allocation1 [shape = 'u32[144,128]{1,0:T(1,128)}', space=vmem, size = 0x12000, scoped, tag = 'internal scratch']
  #allocation2 [shape = 'f32[8,1024]{1,0:T(8,128)}', space=vmem, size = 0x8000, scoped, tag = 'scratch operand']
  %s0 = inlined_call_operand.vmem [shape: bf16[8,128], index: 0, kind: input, shape index: {}]
  %s1 = inlined_call_operand.hbm [shape: bf16[128,1024], index: 1, kind: input, shape index: {}]
  %s2 = inlined_call_operand.vmem [shape: f32[1,1024], index: 2, kind: input, shape index: {}]
  %s3 = inlined_call_operand.vmem [shape: f32[1,1024], index: 3, kind: input, shape index: {}]
  %s4 = inlined_call_operand.hbm [shape: bf16[1024,128], index: 4, kind: input, shape index: {}]
  %s5 = inlined_call_operand.vmem [shape: f32[1,128], index: 5, kind: input, shape index: {}]
  %s6 = inlined_call_operand.vmem [shape: f32[1,128], index: 6, kind: input, shape index: {}]
  %s7 = inlined_call_operand.vmem [shape: f32[8,128], index: 7, kind: output, shape index: {}]
  %s8 = sld [smem:[#allocation0]]
  $region54: #{encoder_forward.1} parent=0
    _
  %s10 = ssub.s32 1, %s8
  %s11 = scalar_select 0, %s10, %s8
  $region1: #{encoder_forward.1} parent=0
    #allocation3 [shape = 'u8[262144]{0}', space=vmem, size = 0x40000, scoped, tag = 'input window, operand 1, single buffered']
    #allocation4 [shape = 's32[1]{0}', space=sflag, size = 0x4, scoped, tag = 'scoped memory for encoder_forward.1']
    #allocation5 [shape = 'u8[262144]{0}', space=vmem, size = 0x40000, scoped, tag = 'input window, operand 4, single buffered']
    #allocation6 [shape = 's32[1]{0}', space=sflag, size = 0x4, scoped, tag = 'scoped memory for encoder_forward.1']
    %12 = vsyncpa [#allocation4], 0
    %13 = vsyncpa [#allocation6], 0
    // Predicated region
    $region2: #{encoder_forward.1} parent=1 // pred_check
      _
    $region3: #{encoder_forward.1} parent=1 // pred_check_branch
      %15 = sbr.rel (0) target = $region5
    $region4: #{encoder_forward.1} parent=1 // pred_region
      _
    $region5: #{encoder_forward.1} parent=1 // pred_fallthru
      _
    // Predicated region
    $region6: #{encoder_forward.1} parent=1 // pred_check
      _
    $region7: #{encoder_forward.1} parent=1 // pred_check_branch
      %17 = sbr.rel (0) target = $region9
    $region8: #{encoder_forward.1} parent=1 // pred_region
      %s19 = ssub.s32 8192, 8192
      %20 = vsyncadd [#allocation4], %s19
      %s21 = sshll.u32 [#allocation3], 4
      %s22 = int_to_ptr.vmem [resolvable:$true] %s21
      %27 = dma.hbm_to_vmem [thread:$0]  %s1, 8192, %s22, [#allocation4], 512, 512, 32
    $region9: #{encoder_forward.1} parent=1 // pred_fallthru
      _
    // Predicated region
    $region10: #{encoder_forward.1} parent=1 // pred_check
      _
    $region11: #{encoder_forward.1} parent=1 // pred_check_branch
      %29 = sbr.rel (0) target = $region13
    $region12: #{encoder_forward.1} parent=1 // pred_region
      _
    $region13: #{encoder_forward.1} parent=1 // pred_fallthru
      _
    // Predicated region
    $region14: #{encoder_forward.1} parent=1 // pred_check
      _
    $region15: #{encoder_forward.1} parent=1 // pred_check_branch
      %31 = sbr.rel (0) target = $region17
    $region16: #{encoder_forward.1} parent=1 // pred_region
      _
    $region17: #{encoder_forward.1} parent=1 // pred_fallthru
      _
    // Predicated region
    $region18: #{encoder_forward.1} parent=1 // pred_check
      _
    $region19: #{encoder_forward.1} parent=1 // pred_check_branch
      %33 = sbr.rel (0) target = $region21
    $region20: #{encoder_forward.1} parent=1 // pred_region
      %s35 = ssub.s32 8192, 8192
      %36 = vsyncadd [#allocation6], %s35
      %s37 = sshll.u32 [#allocation5], 4
      %s38 = int_to_ptr.vmem [resolvable:$true] %s37
      %43 = dma.hbm_to_vmem [thread:$0]  %s4, 8192, %s38, [#allocation6], 64, 64, 4
    $region21: #{encoder_forward.1} parent=1 // pred_fallthru
      _
    // Predicated region
    $region22: #{encoder_forward.1} parent=1 // pred_check
      _
    $region23: #{encoder_forward.1} parent=1 // pred_check_branch
      %45 = sbr.rel (0) target = $region25
    $region24: #{encoder_forward.1} parent=1 // pred_region
      _
    $region25: #{encoder_forward.1} parent=1 // pred_fallthru
      _
    // Predicated region
    $region26: #{encoder_forward.1} parent=1 // pred_check
      _
    $region27: #{encoder_forward.1} parent=1 // pred_check_branch
      %47 = sbr.rel (0) target = $region29
    $region28: #{encoder_forward.1} parent=1 // pred_region
      _
    $region29: #{encoder_forward.1} parent=1 // pred_fallthru
      _
    // Predicated region
    $region30: #{encoder_forward.1} parent=1 // pred_check
      _
    $region31: #{encoder_forward.1} parent=1 // pred_check_branch
      %49 = sbr.rel (0) target = $region33
    $region32: #{encoder_forward.1} parent=1 // pred_region
      %50 = dma.done [#allocation4], 8192
    $region33: #{encoder_forward.1} parent=1 // pred_fallthru
      _
    // Predicated region
    $region34: #{encoder_forward.1} parent=1 // pred_check
      _
    $region35: #{encoder_forward.1} parent=1 // pred_check_branch
      %52 = sbr.rel (0) target = $region37
    $region36: #{encoder_forward.1} parent=1 // pred_region
      %53 = dma.done [#allocation6], 8192
    $region37: #{encoder_forward.1} parent=1 // pred_fallthru
      _
    %p55 = scmp.eq.s32.totalorder 0, 0
    // Predicated region
    $region38: #{encoder_forward.1} parent=1 // pred_check
      %p56 = pneg %p55
    $region39: #{encoder_forward.1} parent=1 // pred_check_branch
      %58 = sbr.rel (%p56) target = $region41
    $region40: #{encoder_forward.1} parent=1 // pred_region
      %59 = vst [vmem:[#allocation2] sm:$0xff] 0.0
      %60 = vst [vmem:[#allocation2 + $0x8] sm:$0xff] 0.0
      %61 = vst [vmem:[#allocation2 + $0x10] sm:$0xff] 0.0
      %62 = vst [vmem:[#allocation2 + $0x18] sm:$0xff] 0.0
      %63 = vst [vmem:[#allocation2 + $0x20] sm:$0xff] 0.0
      %64 = vst [vmem:[#allocation2 + $0x28] sm:$0xff] 0.0
      %65 = vst [vmem:[#allocation2 + $0x30] sm:$0xff] 0.0
      %66 = vst [vmem:[#allocation2 + $0x38] sm:$0xff] 0.0
    $region41: #{encoder_forward.1} parent=1 // pred_fallthru
      _
    %v67 = vld [vmem:[#allocation2] sm:$0xff]
    %v68 = vld [vmem:[#allocation2 + $0x8] sm:$0xff]
    %v69 = vld [vmem:[#allocation2 + $0x10] sm:$0xff]
    %v70 = vld [vmem:[#allocation2 + $0x18] sm:$0xff]
    %v71 = vld [vmem:[#allocation2 + $0x20] sm:$0xff]
    %v72 = vld [vmem:[#allocation2 + $0x28] sm:$0xff]
    %v73 = vld [vmem:[#allocation2 + $0x30] sm:$0xff]
    %v74 = vld [vmem:[#allocation2 + $0x38] sm:$0xff]
    %v75 = vld [vmem:[%s0] sm:$0xf]
    %v76 = vld [vmem:[#allocation3] sm:$0xff]
    %v77 = vld [vmem:[#allocation3 + $0x8] sm:$0xff]
    %v78 = vld [vmem:[#allocation3 + $0x10] sm:$0xff]
    %v79 = vld [vmem:[#allocation3 + $0x18] sm:$0xff]
    %v80 = vld [vmem:[#allocation3 + $0x20] sm:$0xff]
    %v81 = vld [vmem:[#allocation3 + $0x28] sm:$0xff]
    %v82 = vld [vmem:[#allocation3 + $0x30] sm:$0xff]
    %v83 = vld [vmem:[#allocation3 + $0x38] sm:$0xff]
    %v84 = vld [vmem:[#allocation3 + $0x40] sm:$0xff]
    %v85 = vld [vmem:[#allocation3 + $0x48] sm:$0xff]
    %v86 = vld [vmem:[#allocation3 + $0x50] sm:$0xff]
    %v87 = vld [vmem:[#allocation3 + $0x58] sm:$0xff]
    %v88 = vld [vmem:[#allocation3 + $0x60] sm:$0xff]
    %v89 = vld [vmem:[#allocation3 + $0x68] sm:$0xff]
    %v90 = vld [vmem:[#allocation3 + $0x70] sm:$0xff]
    %v91 = vld [vmem:[#allocation3 + $0x78] sm:$0xff]
    %v92 = vld [vmem:[#allocation3 + $0x80] sm:$0xff]
    %v93 = vld [vmem:[#allocation3 + $0x88] sm:$0xff]
    %v94 = vld [vmem:[#allocation3 + $0x90] sm:$0xff]
    %v95 = vld [vmem:[#allocation3 + $0x98] sm:$0xff]
    %v96 = vld [vmem:[#allocation3 + $0xa0] sm:$0xff]
    %v97 = vld [vmem:[#allocation3 + $0xa8] sm:$0xff]
    %v98 = vld [vmem:[#allocation3 + $0xb0] sm:$0xff]
    %v99 = vld [vmem:[#allocation3 + $0xb8] sm:$0xff]
    %v100 = vld [vmem:[#allocation3 + $0xc0] sm:$0xff]
    %v101 = vld [vmem:[#allocation3 + $0xc8] sm:$0xff]
    %v102 = vld [vmem:[#allocation3 + $0xd0] sm:$0xff]
    %v103 = vld [vmem:[#allocation3 + $0xd8] sm:$0xff]
    %v104 = vld [vmem:[#allocation3 + $0xe0] sm:$0xff]
    %v105 = vld [vmem:[#allocation3 + $0xe8] sm:$0xff]
    %v106 = vld [vmem:[#allocation3 + $0xf0] sm:$0xff]
    %v107 = vld [vmem:[#allocation3 + $0xf8] sm:$0xff]
    %v108 = vld [vmem:[#allocation3 + $0x100] sm:$0xff]
    %v109 = vld [vmem:[#allocation3 + $0x108] sm:$0xff]
    %v110 = vld [vmem:[#allocation3 + $0x110] sm:$0xff]
    %v111 = vld [vmem:[#allocation3 + $0x118] sm:$0xff]
    %v112 = vld [vmem:[#allocation3 + $0x120] sm:$0xff]
    %v113 = vld [vmem:[#allocation3 + $0x128] sm:$0xff]
    %v114 = vld [vmem:[#allocation3 + $0x130] sm:$0xff]
    %v115 = vld [vmem:[#allocation3 + $0x138] sm:$0xff]
    %v116 = vld [vmem:[#allocation3 + $0x140] sm:$0xff]
    %v117 = vld [vmem:[#allocation3 + $0x148] sm:$0xff]
    %v118 = vld [vmem:[#allocation3 + $0x150] sm:$0xff]
    %v119 = vld [vmem:[#allocation3 + $0x158] sm:$0xff]
    %v120 = vld [vmem:[#allocation3 + $0x160] sm:$0xff]
    %v121 = vld [vmem:[#allocation3 + $0x168] sm:$0xff]
    %v122 = vld [vmem:[#allocation3 + $0x170] sm:$0xff]
    %v123 = vld [vmem:[#allocation3 + $0x178] sm:$0xff]
    %v124 = vld [vmem:[#allocation3 + $0x180] sm:$0xff]
    %v125 = vld [vmem:[#allocation3 + $0x188] sm:$0xff]
    %v126 = vld [vmem:[#allocation3 + $0x190] sm:$0xff]
    %v127 = vld [vmem:[#allocation3 + $0x198] sm:$0xff]
    %v128 = vld [vmem:[#allocation3 + $0x1a0] sm:$0xff]
    %v129 = vld [vmem:[#allocation3 + $0x1a8] sm:$0xff]
    %v130 = vld [vmem:[#allocation3 + $0x1b0] sm:$0xff]
    %v131 = vld [vmem:[#allocation3 + $0x1b8] sm:$0xff]
    %v132 = vld [vmem:[#allocation3 + $0x1c0] sm:$0xff]
    %v133 = vld [vmem:[#allocation3 + $0x1c8] sm:$0xff]
    %v134 = vld [vmem:[#allocation3 + $0x1d0] sm:$0xff]
    %v135 = vld [vmem:[#allocation3 + $0x1d8] sm:$0xff]
    %v136 = vld [vmem:[#allocation3 + $0x1e0] sm:$0xff]
    %v137 = vld [vmem:[#allocation3 + $0x1e8] sm:$0xff]
    %v138 = vld [vmem:[#allocation3 + $0x1f0] sm:$0xff]
    %v139 = vld [vmem:[#allocation3 + $0x1f8] sm:$0xff]
    %v204 = vunpack.c.l.b16 %v76
    %v205 = vunpack.c.h.b16 %v76
    %v206 = vunpack.c.l.b16 %v77
    %v207 = vunpack.c.h.b16 %v77
    %v208 = vunpack.c.l.b16 %v78
    %v209 = vunpack.c.h.b16 %v78
    %v210 = vunpack.c.l.b16 %v79
    %v211 = vunpack.c.h.b16 %v79
    %v212 = vunpack.c.l.b16 %v80
    %v213 = vunpack.c.h.b16 %v80
    %v214 = vunpack.c.l.b16 %v81
    %v215 = vunpack.c.h.b16 %v81
    %v216 = vunpack.c.l.b16 %v82
    %v217 = vunpack.c.h.b16 %v82
    %v218 = vunpack.c.l.b16 %v83
    %v219 = vunpack.c.h.b16 %v83
    %v220 = vunpack.c.l.b16 %v84
    %v221 = vunpack.c.h.b16 %v84
    %v222 = vunpack.c.l.b16 %v85
    %v223 = vunpack.c.h.b16 %v85
    %v224 = vunpack.c.l.b16 %v86
    %v225 = vunpack.c.h.b16 %v86
    %v226 = vunpack.c.l.b16 %v87
    %v227 = vunpack.c.h.b16 %v87
    %v228 = vunpack.c.l.b16 %v88
    %v229 = vunpack.c.h.b16 %v88
    %v230 = vunpack.c.l.b16 %v89
    %v231 = vunpack.c.h.b16 %v89
    %v232 = vunpack.c.l.b16 %v90
    %v233 = vunpack.c.h.b16 %v90
    %v234 = vunpack.c.l.b16 %v91
    %v235 = vunpack.c.h.b16 %v91
    %v236 = vunpack.c.l.b16 %v92
    %v237 = vunpack.c.h.b16 %v92
    %v238 = vunpack.c.l.b16 %v93
    %v239 = vunpack.c.h.b16 %v93
    %v240 = vunpack.c.l.b16 %v94
    %v241 = vunpack.c.h.b16 %v94
    %v242 = vunpack.c.l.b16 %v95
    %v243 = vunpack.c.h.b16 %v95
    %v244 = vunpack.c.l.b16 %v96
    %v245 = vunpack.c.h.b16 %v96
    %v246 = vunpack.c.l.b16 %v97
    %v247 = vunpack.c.h.b16 %v97
    %v248 = vunpack.c.l.b16 %v98
    %v249 = vunpack.c.h.b16 %v98
    %v250 = vunpack.c.l.b16 %v99
    %v251 = vunpack.c.h.b16 %v99
    %v252 = vunpack.c.l.b16 %v100
    %v253 = vunpack.c.h.b16 %v100
    %v254 = vunpack.c.l.b16 %v101
    %v255 = vunpack.c.h.b16 %v101
    %v256 = vunpack.c.l.b16 %v102
    %v257 = vunpack.c.h.b16 %v102
    %v258 = vunpack.c.l.b16 %v103
    %v259 = vunpack.c.h.b16 %v103
    %v260 = vunpack.c.l.b16 %v104
    %v261 = vunpack.c.h.b16 %v104
    %v262 = vunpack.c.l.b16 %v105
    %v263 = vunpack.c.h.b16 %v105
    %v264 = vunpack.c.l.b16 %v106
    %v265 = vunpack.c.h.b16 %v106
    %v266 = vunpack.c.l.b16 %v107
    %v267 = vunpack.c.h.b16 %v107
    %v268 = vunpack.c.l.b16 %v108
    %v269 = vunpack.c.h.b16 %v108
    %v270 = vunpack.c.l.b16 %v109
    %v271 = vunpack.c.h.b16 %v109
    %v272 = vunpack.c.l.b16 %v110
    %v273 = vunpack.c.h.b16 %v110
    %v274 = vunpack.c.l.b16 %v111
    %v275 = vunpack.c.h.b16 %v111
    %v276 = vunpack.c.l.b16 %v112
    %v277 = vunpack.c.h.b16 %v112
    %v278 = vunpack.c.l.b16 %v113
    %v279 = vunpack.c.h.b16 %v113
    %v280 = vunpack.c.l.b16 %v114
    %v281 = vunpack.c.h.b16 %v114
    %v282 = vunpack.c.l.b16 %v115
    %v283 = vunpack.c.h.b16 %v115
    %v284 = vunpack.c.l.b16 %v116
    %v285 = vunpack.c.h.b16 %v116
    %v286 = vunpack.c.l.b16 %v117
    %v287 = vunpack.c.h.b16 %v117
    %v288 = vunpack.c.l.b16 %v118
    %v289 = vunpack.c.h.b16 %v118
    %v290 = vunpack.c.l.b16 %v119
    %v291 = vunpack.c.h.b16 %v119
    %v292 = vunpack.c.l.b16 %v120
    %v293 = vunpack.c.h.b16 %v120
    %v294 = vunpack.c.l.b16 %v121
    %v295 = vunpack.c.h.b16 %v121
    %v296 = vunpack.c.l.b16 %v122
    %v297 = vunpack.c.h.b16 %v122
    %v298 = vunpack.c.l.b16 %v123
    %v299 = vunpack.c.h.b16 %v123
    %v300 = vunpack.c.l.b16 %v124
    %v301 = vunpack.c.h.b16 %v124
    %v302 = vunpack.c.l.b16 %v125
    %v303 = vunpack.c.h.b16 %v125
    %v304 = vunpack.c.l.b16 %v126
    %v305 = vunpack.c.h.b16 %v126
    %v306 = vunpack.c.l.b16 %v127
    %v307 = vunpack.c.h.b16 %v127
    %v308 = vunpack.c.l.b16 %v128
    %v309 = vunpack.c.h.b16 %v128
    %v310 = vunpack.c.l.b16 %v129
    %v311 = vunpack.c.h.b16 %v129
    %v312 = vunpack.c.l.b16 %v130
    %v313 = vunpack.c.h.b16 %v130
    %v314 = vunpack.c.l.b16 %v131
    %v315 = vunpack.c.h.b16 %v131
    %v316 = vunpack.c.l.b16 %v132
    %v317 = vunpack.c.h.b16 %v132
    %v318 = vunpack.c.l.b16 %v133
    %v319 = vunpack.c.h.b16 %v133
    %v320 = vunpack.c.l.b16 %v134
    %v321 = vunpack.c.h.b16 %v134
    %v322 = vunpack.c.l.b16 %v135
    %v323 = vunpack.c.h.b16 %v135
    %v324 = vunpack.c.l.b16 %v136
    %v325 = vunpack.c.h.b16 %v136
    %v326 = vunpack.c.l.b16 %v137
    %v327 = vunpack.c.h.b16 %v137
    %v328 = vunpack.c.l.b16 %v138
    %v329 = vunpack.c.h.b16 %v138
    %v330 = vunpack.c.l.b16 %v139
    %v331 = vunpack.c.h.b16 %v139
    %v332 = vpack.c.b16 %v212, %v204
    %v333 = vpack.c.b16 %v213, %v205
    %v334 = vpack.c.b16 %v214, %v206
    %v335 = vpack.c.b16 %v215, %v207
    %v336 = vpack.c.b16 %v216, %v208
    %v337 = vpack.c.b16 %v217, %v209
    %v338 = vpack.c.b16 %v218, %v210
    %v339 = vpack.c.b16 %v219, %v211
    %v340 = vpack.c.b16 %v228, %v220
    %v341 = vpack.c.b16 %v229, %v221
    %v342 = vpack.c.b16 %v230, %v222
    %v343 = vpack.c.b16 %v231, %v223
    %v344 = vpack.c.b16 %v232, %v224
    %v345 = vpack.c.b16 %v233, %v225
    %v346 = vpack.c.b16 %v234, %v226
    %v347 = vpack.c.b16 %v235, %v227
    %v348 = vpack.c.b16 %v244, %v236
    %v349 = vpack.c.b16 %v245, %v237
    %v350 = vpack.c.b16 %v246, %v238
    %v351 = vpack.c.b16 %v247, %v239
    %v352 = vpack.c.b16 %v248, %v240
    %v353 = vpack.c.b16 %v249, %v241
    %v354 = vpack.c.b16 %v250, %v242
    %v355 = vpack.c.b16 %v251, %v243
    %v356 = vpack.c.b16 %v260, %v252
    %v357 = vpack.c.b16 %v261, %v253
    %v358 = vpack.c.b16 %v262, %v254
    %v359 = vpack.c.b16 %v263, %v255
    %v360 = vpack.c.b16 %v264, %v256
    %v361 = vpack.c.b16 %v265, %v257
    %v362 = vpack.c.b16 %v266, %v258
    %v363 = vpack.c.b16 %v267, %v259
    %v364 = vpack.c.b16 %v276, %v268
    %v365 = vpack.c.b16 %v277, %v269
    %v366 = vpack.c.b16 %v278, %v270
    %v367 = vpack.c.b16 %v279, %v271
    %v368 = vpack.c.b16 %v280, %v272
    %v369 = vpack.c.b16 %v281, %v273
    %v370 = vpack.c.b16 %v282, %v274
    %v371 = vpack.c.b16 %v283, %v275
    %v372 = vpack.c.b16 %v292, %v284
    %v373 = vpack.c.b16 %v293, %v285
    %v374 = vpack.c.b16 %v294, %v286
    %v375 = vpack.c.b16 %v295, %v287
    %v376 = vpack.c.b16 %v296, %v288
    %v377 = vpack.c.b16 %v297, %v289
    %v378 = vpack.c.b16 %v298, %v290
    %v379 = vpack.c.b16 %v299, %v291
    %v380 = vpack.c.b16 %v308, %v300
    %v381 = vpack.c.b16 %v309, %v301
    %v382 = vpack.c.b16 %v310, %v302
    %v383 = vpack.c.b16 %v311, %v303
    %v384 = vpack.c.b16 %v312, %v304
    %v385 = vpack.c.b16 %v313, %v305
    %v386 = vpack.c.b16 %v314, %v306
    %v387 = vpack.c.b16 %v315, %v307
    %v388 = vpack.c.b16 %v324, %v316
    %v389 = vpack.c.b16 %v325, %v317
    %v390 = vpack.c.b16 %v326, %v318
    %v391 = vpack.c.b16 %v327, %v319
    %v392 = vpack.c.b16 %v328, %v320
    %v393 = vpack.c.b16 %v329, %v321
    %v394 = vpack.c.b16 %v330, %v322
    %v395 = vpack.c.b16 %v331, %v323
    %460 = vmatprep.subr.bf16.mxu0 %v333
    %461 = vmatpush1.bf16.msra.mxu0 %v332
    %462 = vmatprep.subr.bf16.mxu0 %v341
    %463 = vmatpush1.bf16.msra.mxu0 %v340
    %464 = vmatprep.subr.bf16.mxu0 %v349
    %465 = vmatpush1.bf16.msra.mxu0 %v348
    %466 = vmatprep.subr.bf16.mxu0 %v357
    %467 = vmatpush1.bf16.msra.mxu0 %v356
    %468 = vmatprep.subr.bf16.mxu0 %v365
    %469 = vmatpush1.bf16.msra.mxu0 %v364
    %470 = vmatprep.subr.bf16.mxu0 %v373
    %471 = vmatpush1.bf16.msra.mxu0 %v372
    %472 = vmatprep.subr.bf16.mxu0 %v381
    %473 = vmatpush1.bf16.msra.mxu0 %v380
    %474 = vmatprep.subr.bf16.mxu0 %v389
    %475 = vmatpush1.bf16.msra.mxu0 %v388
    %476 = vmatprep.subr.bf16.mxu0 0
    %477 = vmatpush1.bf16.msra.mxu0 0
    %478 = vmatprep.subr.bf16.mxu0 0
    %479 = vmatpush1.bf16.msra.mxu0 0
    %480 = vmatprep.subr.bf16.mxu0 0
    %481 = vmatpush1.bf16.msra.mxu0 0
    %482 = vmatprep.subr.bf16.mxu0 0
    %483 = vmatpush1.bf16.msra.mxu0 0
    %484 = vmatprep.subr.bf16.mxu0 0
    %485 = vmatpush1.bf16.msra.mxu0 0
    %486 = vmatprep.subr.bf16.mxu0 0
    %487 = vmatpush1.bf16.msra.mxu0 0
    %488 = vmatprep.subr.bf16.mxu0 0
    %489 = vmatpush1.bf16.msra.mxu0 0
    %490 = vmatprep.subr.bf16.mxu0 0
    %491 = vmatpush1.bf16.msra.mxu0 0
    %492 = vmatprep.mubr.bf16.mxu0 0
    %493 = vmatmul.mubr.bf16.gmra.mrb[0].mxu0 %v75
    %v494 = vpop.f32.mrb[0].mxu0
    %v495 = vadd.f32 0.0, %v494
    %v496 = vpop.f32.mrb[0].mxu0
    %v497 = vadd.f32 0.0, %v496
    %v498 = vpop.f32.mrb[0].mxu0
    %v499 = vpop.f32.mrb[0].mxu0
    %500 = vdwg.mxu0
    %501 = vmatprep.subr.bf16.mxu0 %v335
    %502 = vmatpush1.bf16.msra.mxu0 %v334
    %503 = vmatprep.subr.bf16.mxu0 %v343
    %504 = vmatpush1.bf16.msra.mxu0 %v342
    %505 = vmatprep.subr.bf16.mxu0 %v351
    %506 = vmatpush1.bf16.msra.mxu0 %v350
    %507 = vmatprep.subr.bf16.mxu0 %v359
    %508 = vmatpush1.bf16.msra.mxu0 %v358
    %509 = vmatprep.subr.bf16.mxu0 %v367
    %510 = vmatpush1.bf16.msra.mxu0 %v366
    %511 = vmatprep.subr.bf16.mxu0 %v375
    %512 = vmatpush1.bf16.msra.mxu0 %v374
    %513 = vmatprep.subr.bf16.mxu0 %v383
    %514 = vmatpush1.bf16.msra.mxu0 %v382
    %515 = vmatprep.subr.bf16.mxu0 %v391
    %516 = vmatpush1.bf16.msra.mxu0 %v390
    %517 = vmatprep.subr.bf16.mxu0 0
    %518 = vmatpush1.bf16.msra.mxu0 0
    %519 = vmatprep.subr.bf16.mxu0 0
    %520 = vmatpush1.bf16.msra.mxu0 0
    %521 = vmatprep.subr.bf16.mxu0 0
    %522 = vmatpush1.bf16.msra.mxu0 0
    %523 = vmatprep.subr.bf16.mxu0 0
    %524 = vmatpush1.bf16.msra.mxu0 0
    %525 = vmatprep.subr.bf16.mxu0 0
    %526 = vmatpush1.bf16.msra.mxu0 0
    %527 = vmatprep.subr.bf16.mxu0 0
    %528 = vmatpush1.bf16.msra.mxu0 0
    %529 = vmatprep.subr.bf16.mxu0 0
    %530 = vmatpush1.bf16.msra.mxu0 0
    %531 = vmatprep.subr.bf16.mxu0 0
    %532 = vmatpush1.bf16.msra.mxu0 0
    %533 = vmatprep.mubr.bf16.mxu0 0
    %534 = vmatmul.mubr.bf16.gmra.mrb[0].mxu0 %v75
    %v535 = vpop.f32.mrb[0].mxu0
    %v536 = vadd.f32 0.0, %v535
    %v537 = vpop.f32.mrb[0].mxu0
    %v538 = vadd.f32 0.0, %v537
    %v539 = vpop.f32.mrb[0].mxu0
    %v540 = vpop.f32.mrb[0].mxu0
    %541 = vdwg.mxu0
    %542 = vmatprep.subr.bf16.mxu0 %v337
    %543 = vmatpush1.bf16.msra.mxu0 %v336
    %544 = vmatprep.subr.bf16.mxu0 %v345
    %545 = vmatpush1.bf16.msra.mxu0 %v344
    %546 = vmatprep.subr.bf16.mxu0 %v353
    %547 = vmatpush1.bf16.msra.mxu0 %v352
    %548 = vmatprep.subr.bf16.mxu0 %v361
    %549 = vmatpush1.bf16.msra.mxu0 %v360
    %550 = vmatprep.subr.bf16.mxu0 %v369
    %551 = vmatpush1.bf16.msra.mxu0 %v368
    %552 = vmatprep.subr.bf16.mxu0 %v377
    %553 = vmatpush1.bf16.msra.mxu0 %v376
    %554 = vmatprep.subr.bf16.mxu0 %v385
    %555 = vmatpush1.bf16.msra.mxu0 %v384
    %556 = vmatprep.subr.bf16.mxu0 %v393
    %557 = vmatpush1.bf16.msra.mxu0 %v392
    %558 = vmatprep.subr.bf16.mxu0 0
    %559 = vmatpush1.bf16.msra.mxu0 0
    %560 = vmatprep.subr.bf16.mxu0 0
    %561 = vmatpush1.bf16.msra.mxu0 0
    %562 = vmatprep.subr.bf16.mxu0 0
    %563 = vmatpush1.bf16.msra.mxu0 0
    %564 = vmatprep.subr.bf16.mxu0 0
    %565 = vmatpush1.bf16.msra.mxu0 0
    %566 = vmatprep.subr.bf16.mxu0 0
    %567 = vmatpush1.bf16.msra.mxu0 0
    %568 = vmatprep.subr.bf16.mxu0 0
    %569 = vmatpush1.bf16.msra.mxu0 0
    %570 = vmatprep.subr.bf16.mxu0 0
    %571 = vmatpush1.bf16.msra.mxu0 0
    %572 = vmatprep.subr.bf16.mxu0 0
    %573 = vmatpush1.bf16.msra.mxu0 0
    %574 = vmatprep.mubr.bf16.mxu0 0
    %575 = vmatmul.mubr.bf16.gmra.mrb[0].mxu0 %v75
    %v576 = vpop.f32.mrb[0].mxu0
    %v577 = vadd.f32 0.0, %v576
    %v578 = vpop.f32.mrb[0].mxu0
    %v579 = vadd.f32 0.0, %v578
    %v580 = vpop.f32.mrb[0].mxu0
    %v581 = vpop.f32.mrb[0].mxu0
    %582 = vdwg.mxu0
    %583 = vmatprep.subr.bf16.mxu0 %v339
    %584 = vmatpush1.bf16.msra.mxu0 %v338
    %585 = vmatprep.subr.bf16.mxu0 %v347
    %586 = vmatpush1.bf16.msra.mxu0 %v346
    %587 = vmatprep.subr.bf16.mxu0 %v355
    %588 = vmatpush1.bf16.msra.mxu0 %v354
    %589 = vmatprep.subr.bf16.mxu0 %v363
    %590 = vmatpush1.bf16.msra.mxu0 %v362
    %591 = vmatprep.subr.bf16.mxu0 %v371
    %592 = vmatpush1.bf16.msra.mxu0 %v370
    %593 = vmatprep.subr.bf16.mxu0 %v379
    %594 = vmatpush1.bf16.msra.mxu0 %v378
    %595 = vmatprep.subr.bf16.mxu0 %v387
    %596 = vmatpush1.bf16.msra.mxu0 %v386
    %597 = vmatprep.subr.bf16.mxu0 %v395
    %598 = vmatpush1.bf16.msra.mxu0 %v394
    %599 = vmatprep.subr.bf16.mxu0 0
    %600 = vmatpush1.bf16.msra.mxu0 0
    %601 = vmatprep.subr.bf16.mxu0 0
    %602 = vmatpush1.bf16.msra.mxu0 0
    %603 = vmatprep.subr.bf16.mxu0 0
    %604 = vmatpush1.bf16.msra.mxu0 0
    %605 = vmatprep.subr.bf16.mxu0 0
    %606 = vmatpush1.bf16.msra.mxu0 0
    %607 = vmatprep.subr.bf16.mxu0 0
    %608 = vmatpush1.bf16.msra.mxu0 0
    %609 = vmatprep.subr.bf16.mxu0 0
    %610 = vmatpush1.bf16.msra.mxu0 0
    %611 = vmatprep.subr.bf16.mxu0 0
    %612 = vmatpush1.bf16.msra.mxu0 0
    %613 = vmatprep.subr.bf16.mxu0 0
    %614 = vmatpush1.bf16.msra.mxu0 0
    %615 = vmatprep.mubr.bf16.mxu0 0
    %616 = vmatmul.mubr.bf16.gmra.mrb[0].mxu0 %v75
    %v617 = vpop.f32.mrb[0].mxu0
    %v618 = vadd.f32 0.0, %v617
    %v619 = vpop.f32.mrb[0].mxu0
    %v620 = vadd.f32 0.0, %v619
    %v621 = vpop.f32.mrb[0].mxu0
    %v622 = vpop.f32.mrb[0].mxu0
    %623 = vdwg.mxu0
    %v624 = vadd.f32 %v67, %v495
    %v625 = vadd.f32 %v68, %v497
    %v626 = vadd.f32 %v69, %v536
    %v627 = vadd.f32 %v70, %v538
    %v628 = vadd.f32 %v71, %v577
    %v629 = vadd.f32 %v72, %v579
    %v630 = vadd.f32 %v73, %v618
    %v631 = vadd.f32 %v74, %v620
    %632 = vst [vmem:[#allocation2] sm:$0xff] %v624
    %633 = vst [vmem:[#allocation2 + $0x8] sm:$0xff] %v625
    %634 = vst [vmem:[#allocation2 + $0x10] sm:$0xff] %v626
    %635 = vst [vmem:[#allocation2 + $0x18] sm:$0xff] %v627
    %636 = vst [vmem:[#allocation2 + $0x20] sm:$0xff] %v628
    %637 = vst [vmem:[#allocation2 + $0x28] sm:$0xff] %v629
    %638 = vst [vmem:[#allocation2 + $0x30] sm:$0xff] %v630
    %639 = vst [vmem:[#allocation2 + $0x38] sm:$0xff] %v631
    // Predicated region
    $region42: #{encoder_forward.1} parent=1 // pred_check
      %p640 = pneg %p55
    $region43: #{encoder_forward.1} parent=1 // pred_check_branch
      %642 = sbr.rel (%p640) target = $region45
    $region44: #{encoder_forward.1} parent=1 // pred_region
      %v643 = vld [vmem:[#allocation2] sm:$0xff]
      %v644 = vld [vmem:[#allocation2 + $0x8] sm:$0xff]
      %v645 = vld [vmem:[#allocation2 + $0x10] sm:$0xff]
      %v646 = vld [vmem:[#allocation2 + $0x18] sm:$0xff]
      %v647 = vld [vmem:[#allocation2 + $0x20] sm:$0xff]
      %v648 = vld [vmem:[#allocation2 + $0x28] sm:$0xff]
      %v649 = vld [vmem:[#allocation2 + $0x30] sm:$0xff]
      %v650 = vld [vmem:[#allocation2 + $0x38] sm:$0xff]
      %v651 = vld [vmem:[%s2] sm:$0xff]
      %v652 = vld [vmem:[%s3] sm:$0xff]
      %v653 = vrot.slane %v643, 4
      %v654 = vadd.f32 %v643, %v653
      %v655 = vrot.slane %v654, 2
      %v656 = vadd.f32 %v654, %v655
      %v657 = vrot.slane %v656, 1
      %v658 = vadd.f32 %v656, %v657
      %v659 = vrot.slane %v644, 4
      %v660 = vadd.f32 %v644, %v659
      %v661 = vrot.slane %v660, 2
      %v662 = vadd.f32 %v660, %v661
      %v663 = vrot.slane %v662, 1
      %v664 = vadd.f32 %v662, %v663
      %v665 = vrot.slane %v645, 4
      %v666 = vadd.f32 %v645, %v665
      %v667 = vrot.slane %v666, 2
      %v668 = vadd.f32 %v666, %v667
      %v669 = vrot.slane %v668, 1
      %v670 = vadd.f32 %v668, %v669
      %v671 = vrot.slane %v646, 4
      %v672 = vadd.f32 %v646, %v671
      %v673 = vrot.slane %v672, 2
      %v674 = vadd.f32 %v672, %v673
      %v675 = vrot.slane %v674, 1
      %v676 = vadd.f32 %v674, %v675
      %v677 = vrot.slane %v647, 4
      %v678 = vadd.f32 %v647, %v677
      %v679 = vrot.slane %v678, 2
      %v680 = vadd.f32 %v678, %v679
      %v681 = vrot.slane %v680, 1
      %v682 = vadd.f32 %v680, %v681
      %v683 = vrot.slane %v648, 4
      %v684 = vadd.f32 %v648, %v683
      %v685 = vrot.slane %v684, 2
      %v686 = vadd.f32 %v684, %v685
      %v687 = vrot.slane %v686, 1
      %v688 = vadd.f32 %v686, %v687
      %v689 = vrot.slane %v649, 4
      %v690 = vadd.f32 %v649, %v689
      %v691 = vrot.slane %v690, 2
      %v692 = vadd.f32 %v690, %v691
      %v693 = vrot.slane %v692, 1
      %v694 = vadd.f32 %v692, %v693
      %v695 = vrot.slane %v650, 4
      %v696 = vadd.f32 %v650, %v695
      %v697 = vrot.slane %v696, 2
      %v698 = vadd.f32 %v696, %v697
      %v699 = vrot.slane %v698, 1
      %v700 = vadd.f32 %v698, %v699
      %v701 = vmul.f32 %v658, 0.125
      %v702 = vmul.f32 %v664, 0.125
      %v703 = vmul.f32 %v670, 0.125
      %v704 = vmul.f32 %v676, 0.125
      %v705 = vmul.f32 %v682, 0.125
      %v706 = vmul.f32 %v688, 0.125
      %v707 = vmul.f32 %v694, 0.125
      %v708 = vmul.f32 %v700, 0.125
      %v709 = vsub.f32 %v643, %v701
      %v710 = vsub.f32 %v644, %v702
      %v711 = vsub.f32 %v645, %v703
      %v712 = vsub.f32 %v646, %v704
      %v713 = vsub.f32 %v647, %v705
      %v714 = vsub.f32 %v648, %v706
      %v715 = vsub.f32 %v649, %v707
      %v716 = vsub.f32 %v650, %v708
      %v717 = vmul.f32 %v709, %v709
      %v718 = vmul.f32 %v710, %v710
      %v719 = vmul.f32 %v711, %v711
      %v720 = vmul.f32 %v712, %v712
      %v721 = vmul.f32 %v713, %v713
      %v722 = vmul.f32 %v714, %v714
      %v723 = vmul.f32 %v715, %v715
      %v724 = vmul.f32 %v716, %v716
      %v725 = vrot.slane %v717, 4
      %v726 = vadd.f32 %v717, %v725
      %v727 = vrot.slane %v726, 2
      %v728 = vadd.f32 %v726, %v727
      %v729 = vrot.slane %v728, 1
      %v730 = vadd.f32 %v728, %v729
      %v731 = vrot.slane %v718, 4
      %v732 = vadd.f32 %v718, %v731
      %v733 = vrot.slane %v732, 2
      %v734 = vadd.f32 %v732, %v733
      %v735 = vrot.slane %v734, 1
      %v736 = vadd.f32 %v734, %v735
      %v737 = vrot.slane %v719, 4
      %v738 = vadd.f32 %v719, %v737
      %v739 = vrot.slane %v738, 2
      %v740 = vadd.f32 %v738, %v739
      %v741 = vrot.slane %v740, 1
      %v742 = vadd.f32 %v740, %v741
      %v743 = vrot.slane %v720, 4
      %v744 = vadd.f32 %v720, %v743
      %v745 = vrot.slane %v744, 2
      %v746 = vadd.f32 %v744, %v745
      %v747 = vrot.slane %v746, 1
      %v748 = vadd.f32 %v746, %v747
      %v749 = vrot.slane %v721, 4
      %v750 = vadd.f32 %v721, %v749
      %v751 = vrot.slane %v750, 2
      %v752 = vadd.f32 %v750, %v751
      %v753 = vrot.slane %v752, 1
      %v754 = vadd.f32 %v752, %v753
      %v755 = vrot.slane %v722, 4
      %v756 = vadd.f32 %v722, %v755
      %v757 = vrot.slane %v756, 2
      %v758 = vadd.f32 %v756, %v757
      %v759 = vrot.slane %v758, 1
      %v760 = vadd.f32 %v758, %v759
      %v761 = vrot.slane %v723, 4
      %v762 = vadd.f32 %v723, %v761
      %v763 = vrot.slane %v762, 2
      %v764 = vadd.f32 %v762, %v763
      %v765 = vrot.slane %v764, 1
      %v766 = vadd.f32 %v764, %v765
      %v767 = vrot.slane %v724, 4
      %v768 = vadd.f32 %v724, %v767
      %v769 = vrot.slane %v768, 2
      %v770 = vadd.f32 %v768, %v769
      %v771 = vrot.slane %v770, 1
      %v772 = vadd.f32 %v770, %v771
      %v773 = vmul.f32 %v730, 0.125
      %v774 = vmul.f32 %v736, 0.125
      %v775 = vmul.f32 %v742, 0.125
      %v776 = vmul.f32 %v748, 0.125
      %v777 = vmul.f32 %v754, 0.125
      %v778 = vmul.f32 %v760, 0.125
      %v779 = vmul.f32 %v766, 0.125
      %v780 = vmul.f32 %v772, 0.125
      %v781 = vadd.f32 %v773, 1e-05
      %v782 = vadd.f32 %v774, 1e-05
      %v783 = vadd.f32 %v775, 1e-05
      %v784 = vadd.f32 %v776, 1e-05
      %v785 = vadd.f32 %v777, 1e-05
      %v786 = vadd.f32 %v778, 1e-05
      %v787 = vadd.f32 %v779, 1e-05
      %v788 = vadd.f32 %v780, 1e-05
      %v789 = vrsqrt.pop %v781
      %v790 = vrsqrt.pop %v782
      %v791 = vrsqrt.pop %v783
      %v792 = vrsqrt.pop %v784
      %v793 = vrsqrt.pop %v785
      %v794 = vrsqrt.pop %v786
      %v795 = vrsqrt.pop %v787
      %v796 = vrsqrt.pop %v788
      %v797 = vmul.f32 %v709, %v789
      %v798 = vmul.f32 %v710, %v790
      %v799 = vmul.f32 %v711, %v791
      %v800 = vmul.f32 %v712, %v792
      %v801 = vmul.f32 %v713, %v793
      %v802 = vmul.f32 %v714, %v794
      %v803 = vmul.f32 %v715, %v795
      %v804 = vmul.f32 %v716, %v796
      %v806 = vlaneseq
      %v807 = vshrl.u32 %v806, 7
      %v808 = vsub.s32 0, %v807
      %v809 = vrot.slane %v651, %v808
      %v810 = vlaneseq
      %v811 = vshrl.u32 %v810, 7
      %v812 = vsub.s32 1, %v811
      %v813 = vrot.slane %v651, %v812
      %v814 = vlaneseq
      %v815 = vshrl.u32 %v814, 7
      %v816 = vsub.s32 2, %v815
      %v817 = vrot.slane %v651, %v816
      %v818 = vlaneseq
      %v819 = vshrl.u32 %v818, 7
      %v820 = vsub.s32 3, %v819
      %v821 = vrot.slane %v651, %v820
      %v822 = vlaneseq
      %v823 = vshrl.u32 %v822, 7
      %v824 = vsub.s32 4, %v823
      %v825 = vrot.slane %v651, %v824
      %v826 = vlaneseq
      %v827 = vshrl.u32 %v826, 7
      %v828 = vsub.s32 5, %v827
      %v829 = vrot.slane %v651, %v828
      %v830 = vlaneseq
      %v831 = vshrl.u32 %v830, 7
      %v832 = vsub.s32 6, %v831
      %v833 = vrot.slane %v651, %v832
      %v834 = vlaneseq
      %v835 = vshrl.u32 %v834, 7
      %v836 = vsub.s32 7, %v835
      %v837 = vrot.slane %v651, %v836
      %v846 = vmul.f32 %v797, %v809
      %v847 = vmul.f32 %v798, %v813
      %v848 = vmul.f32 %v799, %v817
      %v849 = vmul.f32 %v800, %v821
      %v850 = vmul.f32 %v801, %v825
      %v851 = vmul.f32 %v802, %v829
      %v852 = vmul.f32 %v803, %v833
      %v853 = vmul.f32 %v804, %v837
      %v855 = vlaneseq
      %v856 = vshrl.u32 %v855, 7
      %v857 = vsub.s32 0, %v856
      %v858 = vrot.slane %v652, %v857
      %v859 = vlaneseq
      %v860 = vshrl.u32 %v859, 7
      %v861 = vsub.s32 1, %v860
      %v862 = vrot.slane %v652, %v861
      %v863 = vlaneseq
      %v864 = vshrl.u32 %v863, 7
      %v865 = vsub.s32 2, %v864
      %v866 = vrot.slane %v652, %v865
      %v867 = vlaneseq
      %v868 = vshrl.u32 %v867, 7
      %v869 = vsub.s32 3, %v868
      %v870 = vrot.slane %v652, %v869
      %v871 = vlaneseq
      %v872 = vshrl.u32 %v871, 7
      %v873 = vsub.s32 4, %v872
      %v874 = vrot.slane %v652, %v873
      %v875 = vlaneseq
      %v876 = vshrl.u32 %v875, 7
      %v877 = vsub.s32 5, %v876
      %v878 = vrot.slane %v652, %v877
      %v879 = vlaneseq
      %v880 = vshrl.u32 %v879, 7
      %v881 = vsub.s32 6, %v880
      %v882 = vrot.slane %v652, %v881
      %v883 = vlaneseq
      %v884 = vshrl.u32 %v883, 7
      %v885 = vsub.s32 7, %v884
      %v886 = vrot.slane %v652, %v885
      %v895 = vadd.f32 %v846, %v858
      %v896 = vadd.f32 %v847, %v862
      %v897 = vadd.f32 %v848, %v866
      %v898 = vadd.f32 %v849, %v870
      %v899 = vadd.f32 %v850, %v874
      %v900 = vadd.f32 %v851, %v878
      %v901 = vadd.f32 %v852, %v882
      %v902 = vadd.f32 %v853, %v886
      %vm903 = vcmp.gt.f32.partialorder %v895, 0.0
      %vm904 = vcmp.gt.f32.partialorder %v896, 0.0
      %vm905 = vcmp.gt.f32.partialorder %v897, 0.0
      %vm906 = vcmp.gt.f32.partialorder %v898, 0.0
      %vm907 = vcmp.gt.f32.partialorder %v899, 0.0
      %vm908 = vcmp.gt.f32.partialorder %v900, 0.0
      %vm909 = vcmp.gt.f32.partialorder %v901, 0.0
      %vm910 = vcmp.gt.f32.partialorder %v902, 0.0
      %v911 = vmul.f32 %v895, 0.1
      %v912 = vmul.f32 %v896, 0.1
      %v913 = vmul.f32 %v897, 0.1
      %v914 = vmul.f32 %v898, 0.1
      %v915 = vmul.f32 %v899, 0.1
      %v916 = vmul.f32 %v900, 0.1
      %v917 = vmul.f32 %v901, 0.1
      %v918 = vmul.f32 %v902, 0.1
      %v919 = vsel %vm903, %v895, %v911
      %v920 = vsel %vm904, %v896, %v912
      %v921 = vsel %vm905, %v897, %v913
      %v922 = vsel %vm906, %v898, %v914
      %v923 = vsel %vm907, %v899, %v915
      %v924 = vsel %vm908, %v900, %v916
      %v925 = vsel %vm909, %v901, %v917
      %v926 = vsel %vm910, %v902, %v918
      %v927 = vpack.c.bf16 %v919, %v919
      %v928 = vpack.c.bf16 %v920, %v920
      %v929 = vpack.c.bf16 %v921, %v921
      %v930 = vpack.c.bf16 %v922, %v922
      %v931 = vpack.c.bf16 %v923, %v923
      %v932 = vpack.c.bf16 %v924, %v924
      %v933 = vpack.c.bf16 %v925, %v925
      %v934 = vpack.c.bf16 %v926, %v926
      %v935 = vld [vmem:[#allocation5] sm:$0xf]
      %v936 = vld [vmem:[#allocation5 + $0x4] sm:$0xf]
      %v937 = vld [vmem:[#allocation5 + $0x8] sm:$0xf]
      %v938 = vld [vmem:[#allocation5 + $0xc] sm:$0xf]
      %v939 = vld [vmem:[#allocation5 + $0x10] sm:$0xf]
      %v940 = vld [vmem:[#allocation5 + $0x14] sm:$0xf]
      %v941 = vld [vmem:[#allocation5 + $0x18] sm:$0xf]
      %v942 = vld [vmem:[#allocation5 + $0x1c] sm:$0xf]
      %v943 = vld [vmem:[#allocation5 + $0x20] sm:$0xf]
      %v944 = vld [vmem:[#allocation5 + $0x24] sm:$0xf]
      %v945 = vld [vmem:[#allocation5 + $0x28] sm:$0xf]
      %v946 = vld [vmem:[#allocation5 + $0x2c] sm:$0xf]
      %v947 = vld [vmem:[#allocation5 + $0x30] sm:$0xf]
      %v948 = vld [vmem:[#allocation5 + $0x34] sm:$0xf]
      %v949 = vld [vmem:[#allocation5 + $0x38] sm:$0xf]
      %v950 = vld [vmem:[#allocation5 + $0x3c] sm:$0xf]
      %v951 = vld [vmem:[#allocation5 + $0x40] sm:$0xf]
      %v952 = vld [vmem:[#allocation5 + $0x44] sm:$0xf]
      %v953 = vld [vmem:[#allocation5 + $0x48] sm:$0xf]
      %v954 = vld [vmem:[#allocation5 + $0x4c] sm:$0xf]
      %v955 = vld [vmem:[#allocation5 + $0x50] sm:$0xf]
      %v956 = vld [vmem:[#allocation5 + $0x54] sm:$0xf]
      %v957 = vld [vmem:[#allocation5 + $0x58] sm:$0xf]
      %v958 = vld [vmem:[#allocation5 + $0x5c] sm:$0xf]
      %v959 = vld [vmem:[#allocation5 + $0x60] sm:$0xf]
      %v960 = vld [vmem:[#allocation5 + $0x64] sm:$0xf]
      %v961 = vld [vmem:[#allocation5 + $0x68] sm:$0xf]
      %v962 = vld [vmem:[#allocation5 + $0x6c] sm:$0xf]
      %v963 = vld [vmem:[#allocation5 + $0x70] sm:$0xf]
      %v964 = vld [vmem:[#allocation5 + $0x74] sm:$0xf]
      %v965 = vld [vmem:[#allocation5 + $0x78] sm:$0xf]
      %v966 = vld [vmem:[#allocation5 + $0x7c] sm:$0xf]
      %v967 = vld [vmem:[#allocation5 + $0x80] sm:$0xf]
      %v968 = vld [vmem:[#allocation5 + $0x84] sm:$0xf]
      %v969 = vld [vmem:[#allocation5 + $0x88] sm:$0xf]
      %v970 = vld [vmem:[#allocation5 + $0x8c] sm:$0xf]
      %v971 = vld [vmem:[#allocation5 + $0x90] sm:$0xf]
      %v972 = vld [vmem:[#allocation5 + $0x94] sm:$0xf]
      %v973 = vld [vmem:[#allocation5 + $0x98] sm:$0xf]
      %v974 = vld [vmem:[#allocation5 + $0x9c] sm:$0xf]
      %v975 = vld [vmem:[#allocation5 + $0xa0] sm:$0xf]
      %v976 = vld [vmem:[#allocation5 + $0xa4] sm:$0xf]
      %v977 = vld [vmem:[#allocation5 + $0xa8] sm:$0xf]
      %v978 = vld [vmem:[#allocation5 + $0xac] sm:$0xf]
      %v979 = vld [vmem:[#allocation5 + $0xb0] sm:$0xf]
      %v980 = vld [vmem:[#allocation5 + $0xb4] sm:$0xf]
      %v981 = vld [vmem:[#allocation5 + $0xb8] sm:$0xf]
      %v982 = vld [vmem:[#allocation5 + $0xbc] sm:$0xf]
      %v983 = vld [vmem:[#allocation5 + $0xc0] sm:$0xf]
      %v984 = vld [vmem:[#allocation5 + $0xc4] sm:$0xf]
      %v985 = vld [vmem:[#allocation5 + $0xc8] sm:$0xf]
      %v986 = vld [vmem:[#allocation5 + $0xcc] sm:$0xf]
      %v987 = vld [vmem:[#allocation5 + $0xd0] sm:$0xf]
      %v988 = vld [vmem:[#allocation5 + $0xd4] sm:$0xf]
      %v989 = vld [vmem:[#allocation5 + $0xd8] sm:$0xf]
      %v990 = vld [vmem:[#allocation5 + $0xdc] sm:$0xf]
      %v991 = vld [vmem:[#allocation5 + $0xe0] sm:$0xf]
      %v992 = vld [vmem:[#allocation5 + $0xe4] sm:$0xf]
      %v993 = vld [vmem:[#allocation5 + $0xe8] sm:$0xf]
      %v994 = vld [vmem:[#allocation5 + $0xec] sm:$0xf]
      %v995 = vld [vmem:[#allocation5 + $0xf0] sm:$0xf]
      %v996 = vld [vmem:[#allocation5 + $0xf4] sm:$0xf]
      %v997 = vld [vmem:[#allocation5 + $0xf8] sm:$0xf]
      %v998 = vld [vmem:[#allocation5 + $0xfc] sm:$0xf]
      %v999 = vld [vmem:[#allocation5 + $0x100] sm:$0xf]
      %v1000 = vld [vmem:[#allocation5 + $0x104] sm:$0xf]
      %v1001 = vld [vmem:[#allocation5 + $0x108] sm:$0xf]
      %v1002 = vld [vmem:[#allocation5 + $0x10c] sm:$0xf]
      %v1003 = vld [vmem:[#allocation5 + $0x110] sm:$0xf]
      %v1004 = vld [vmem:[#allocation5 + $0x114] sm:$0xf]
      %v1005 = vld [vmem:[#allocation5 + $0x118] sm:$0xf]
      %v1006 = vld [vmem:[#allocation5 + $0x11c] sm:$0xf]
      %v1007 = vld [vmem:[#allocation5 + $0x120] sm:$0xf]
      %v1008 = vld [vmem:[#allocation5 + $0x124] sm:$0xf]
      %v1009 = vld [vmem:[#allocation5 + $0x128] sm:$0xf]
      %v1010 = vld [vmem:[#allocation5 + $0x12c] sm:$0xf]
      %v1011 = vld [vmem:[#allocation5 + $0x130] sm:$0xf]
      %v1012 = vld [vmem:[#allocation5 + $0x134] sm:$0xf]
      %v1013 = vld [vmem:[#allocation5 + $0x138] sm:$0xf]
      %v1014 = vld [vmem:[#allocation5 + $0x13c] sm:$0xf]
      %v1015 = vld [vmem:[#allocation5 + $0x140] sm:$0xf]
      %v1016 = vld [vmem:[#allocation5 + $0x144] sm:$0xf]
      %v1017 = vld [vmem:[#allocation5 + $0x148] sm:$0xf]
      %v1018 = vld [vmem:[#allocation5 + $0x14c] sm:$0xf]
      %v1019 = vld [vmem:[#allocation5 + $0x150] sm:$0xf]
      %v1020 = vld [vmem:[#allocation5 + $0x154] sm:$0xf]
      %v1021 = vld [vmem:[#allocation5 + $0x158] sm:$0xf]
      %v1022 = vld [vmem:[#allocation5 + $0x15c] sm:$0xf]
      %v1023 = vld [vmem:[#allocation5 + $0x160] sm:$0xf]
      %v1024 = vld [vmem:[#allocation5 + $0x164] sm:$0xf]
      %v1025 = vld [vmem:[#allocation5 + $0x168] sm:$0xf]
      %v1026 = vld [vmem:[#allocation5 + $0x16c] sm:$0xf]
      %v1027 = vld [vmem:[#allocation5 + $0x170] sm:$0xf]
      %v1028 = vld [vmem:[#allocation5 + $0x174] sm:$0xf]
      %v1029 = vld [vmem:[#allocation5 + $0x178] sm:$0xf]
      %v1030 = vld [vmem:[#allocation5 + $0x17c] sm:$0xf]
      %v1031 = vld [vmem:[#allocation5 + $0x180] sm:$0xf]
      %v1032 = vld [vmem:[#allocation5 + $0x184] sm:$0xf]
      %v1033 = vld [vmem:[#allocation5 + $0x188] sm:$0xf]
      %v1034 = vld [vmem:[#allocation5 + $0x18c] sm:$0xf]
      %v1035 = vld [vmem:[#allocation5 + $0x190] sm:$0xf]
      %v1036 = vld [vmem:[#allocation5 + $0x194] sm:$0xf]
      %v1037 = vld [vmem:[#allocation5 + $0x198] sm:$0xf]
      %v1038 = vld [vmem:[#allocation5 + $0x19c] sm:$0xf]
      %v1039 = vld [vmem:[#allocation5 + $0x1a0] sm:$0xf]
      %v1040 = vld [vmem:[#allocation5 + $0x1a4] sm:$0xf]
      %v1041 = vld [vmem:[#allocation5 + $0x1a8] sm:$0xf]
      %v1042 = vld [vmem:[#allocation5 + $0x1ac] sm:$0xf]
      %v1043 = vld [vmem:[#allocation5 + $0x1b0] sm:$0xf]
      %v1044 = vld [vmem:[#allocation5 + $0x1b4] sm:$0xf]
      %v1045 = vld [vmem:[#allocation5 + $0x1b8] sm:$0xf]
      %v1046 = vld [vmem:[#allocation5 + $0x1bc] sm:$0xf]
      %v1047 = vld [vmem:[#allocation5 + $0x1c0] sm:$0xf]
      %v1048 = vld [vmem:[#allocation5 + $0x1c4] sm:$0xf]
      %v1049 = vld [vmem:[#allocation5 + $0x1c8] sm:$0xf]
      %v1050 = vld [vmem:[#allocation5 + $0x1cc] sm:$0xf]
      %v1051 = vld [vmem:[#allocation5 + $0x1d0] sm:$0xf]
      %v1052 = vld [vmem:[#allocation5 + $0x1d4] sm:$0xf]
      %v1053 = vld [vmem:[#allocation5 + $0x1d8] sm:$0xf]
      %v1054 = vld [vmem:[#allocation5 + $0x1dc] sm:$0xf]
      %v1055 = vld [vmem:[#allocation5 + $0x1e0] sm:$0xf]
      %v1056 = vld [vmem:[#allocation5 + $0x1e4] sm:$0xf]
      %v1057 = vld [vmem:[#allocation5 + $0x1e8] sm:$0xf]
      %v1058 = vld [vmem:[#allocation5 + $0x1ec] sm:$0xf]
      %v1059 = vld [vmem:[#allocation5 + $0x1f0] sm:$0xf]
      %v1060 = vld [vmem:[#allocation5 + $0x1f4] sm:$0xf]
      %v1061 = vld [vmem:[#allocation5 + $0x1f8] sm:$0xf]
      %v1062 = vld [vmem:[#allocation5 + $0x1fc] sm:$0xf]
      %v1191 = vunpack.c.l.b16 %v935
      %v1192 = vunpack.c.l.b16 %v936
      %v1193 = vunpack.c.l.b16 %v937
      %v1194 = vunpack.c.l.b16 %v938
      %v1195 = vunpack.c.l.b16 %v939
      %v1196 = vunpack.c.l.b16 %v940
      %v1197 = vunpack.c.l.b16 %v941
      %v1198 = vunpack.c.l.b16 %v942
      %v1199 = vunpack.c.l.b16 %v943
      %v1200 = vunpack.c.l.b16 %v944
      %v1201 = vunpack.c.l.b16 %v945
      %v1202 = vunpack.c.l.b16 %v946
      %v1203 = vunpack.c.l.b16 %v947
      %v1204 = vunpack.c.l.b16 %v948
      %v1205 = vunpack.c.l.b16 %v949
      %v1206 = vunpack.c.l.b16 %v950
      %v1207 = vunpack.c.l.b16 %v951
      %v1208 = vunpack.c.l.b16 %v952
      %v1209 = vunpack.c.l.b16 %v953
      %v1210 = vunpack.c.l.b16 %v954
      %v1211 = vunpack.c.l.b16 %v955
      %v1212 = vunpack.c.l.b16 %v956
      %v1213 = vunpack.c.l.b16 %v957
      %v1214 = vunpack.c.l.b16 %v958
      %v1215 = vunpack.c.l.b16 %v959
      %v1216 = vunpack.c.l.b16 %v960
      %v1217 = vunpack.c.l.b16 %v961
      %v1218 = vunpack.c.l.b16 %v962
      %v1219 = vunpack.c.l.b16 %v963
      %v1220 = vunpack.c.l.b16 %v964
      %v1221 = vunpack.c.l.b16 %v965
      %v1222 = vunpack.c.l.b16 %v966
      %v1223 = vunpack.c.l.b16 %v967
      %v1224 = vunpack.c.l.b16 %v968
      %v1225 = vunpack.c.l.b16 %v969
      %v1226 = vunpack.c.l.b16 %v970
      %v1227 = vunpack.c.l.b16 %v971
      %v1228 = vunpack.c.l.b16 %v972
      %v1229 = vunpack.c.l.b16 %v973
      %v1230 = vunpack.c.l.b16 %v974
      %v1231 = vunpack.c.l.b16 %v975
      %v1232 = vunpack.c.l.b16 %v976
      %v1233 = vunpack.c.l.b16 %v977
      %v1234 = vunpack.c.l.b16 %v978
      %v1235 = vunpack.c.l.b16 %v979
      %v1236 = vunpack.c.l.b16 %v980
      %v1237 = vunpack.c.l.b16 %v981
      %v1238 = vunpack.c.l.b16 %v982
      %v1239 = vunpack.c.l.b16 %v983
      %v1240 = vunpack.c.l.b16 %v984
      %v1241 = vunpack.c.l.b16 %v985
      %v1242 = vunpack.c.l.b16 %v986
      %v1243 = vunpack.c.l.b16 %v987
      %v1244 = vunpack.c.l.b16 %v988
      %v1245 = vunpack.c.l.b16 %v989
      %v1246 = vunpack.c.l.b16 %v990
      %v1247 = vunpack.c.l.b16 %v991
      %v1248 = vunpack.c.l.b16 %v992
      %v1249 = vunpack.c.l.b16 %v993
      %v1250 = vunpack.c.l.b16 %v994
      %v1251 = vunpack.c.l.b16 %v995
      %v1252 = vunpack.c.l.b16 %v996
      %v1253 = vunpack.c.l.b16 %v997
      %v1254 = vunpack.c.l.b16 %v998
      %v1255 = vunpack.c.l.b16 %v999
      %v1256 = vunpack.c.l.b16 %v1000
      %v1257 = vunpack.c.l.b16 %v1001
      %v1258 = vunpack.c.l.b16 %v1002
      %v1259 = vunpack.c.l.b16 %v1003
      %v1260 = vunpack.c.l.b16 %v1004
      %v1261 = vunpack.c.l.b16 %v1005
      %v1262 = vunpack.c.l.b16 %v1006
      %v1263 = vunpack.c.l.b16 %v1007
      %v1264 = vunpack.c.l.b16 %v1008
      %v1265 = vunpack.c.l.b16 %v1009
      %v1266 = vunpack.c.l.b16 %v1010
      %v1267 = vunpack.c.l.b16 %v1011
      %v1268 = vunpack.c.l.b16 %v1012
      %v1269 = vunpack.c.l.b16 %v1013
      %v1270 = vunpack.c.l.b16 %v1014
      %v1271 = vunpack.c.l.b16 %v1015
      %v1272 = vunpack.c.l.b16 %v1016
      %v1273 = vunpack.c.l.b16 %v1017
      %v1274 = vunpack.c.l.b16 %v1018
      %v1275 = vunpack.c.l.b16 %v1019
      %v1276 = vunpack.c.l.b16 %v1020
      %v1277 = vunpack.c.l.b16 %v1021
      %v1278 = vunpack.c.l.b16 %v1022
      %v1279 = vunpack.c.l.b16 %v1023
      %v1280 = vunpack.c.l.b16 %v1024
      %v1281 = vunpack.c.l.b16 %v1025
      %v1282 = vunpack.c.l.b16 %v1026
      %v1283 = vunpack.c.l.b16 %v1027
      %v1284 = vunpack.c.l.b16 %v1028
      %v1285 = vunpack.c.l.b16 %v1029
      %v1286 = vunpack.c.l.b16 %v1030
      %v1287 = vunpack.c.l.b16 %v1031
      %v1288 = vunpack.c.l.b16 %v1032
      %v1289 = vunpack.c.l.b16 %v1033
      %v1290 = vunpack.c.l.b16 %v1034
      %v1291 = vunpack.c.l.b16 %v1035
      %v1292 = vunpack.c.l.b16 %v1036
      %v1293 = vunpack.c.l.b16 %v1037
      %v1294 = vunpack.c.l.b16 %v1038
      %v1295 = vunpack.c.l.b16 %v1039
      %v1296 = vunpack.c.l.b16 %v1040
      %v1297 = vunpack.c.l.b16 %v1041
      %v1298 = vunpack.c.l.b16 %v1042
      %v1299 = vunpack.c.l.b16 %v1043
      %v1300 = vunpack.c.l.b16 %v1044
      %v1301 = vunpack.c.l.b16 %v1045
      %v1302 = vunpack.c.l.b16 %v1046
      %v1303 = vunpack.c.l.b16 %v1047
      %v1304 = vunpack.c.l.b16 %v1048
      %v1305 = vunpack.c.l.b16 %v1049
      %v1306 = vunpack.c.l.b16 %v1050
      %v1307 = vunpack.c.l.b16 %v1051
      %v1308 = vunpack.c.l.b16 %v1052
      %v1309 = vunpack.c.l.b16 %v1053
      %v1310 = vunpack.c.l.b16 %v1054
      %v1311 = vunpack.c.l.b16 %v1055
      %v1312 = vunpack.c.l.b16 %v1056
      %v1313 = vunpack.c.l.b16 %v1057
      %v1314 = vunpack.c.l.b16 %v1058
      %v1315 = vunpack.c.l.b16 %v1059
      %v1316 = vunpack.c.l.b16 %v1060
      %v1317 = vunpack.c.l.b16 %v1061
      %v1318 = vunpack.c.l.b16 %v1062
      %v1319 = vpack.c.b16 %v1192, %v1191
      %v1320 = vpack.c.b16 %v1194, %v1193
      %v1321 = vpack.c.b16 %v1196, %v1195
      %v1322 = vpack.c.b16 %v1198, %v1197
      %v1323 = vpack.c.b16 %v1200, %v1199
      %v1324 = vpack.c.b16 %v1202, %v1201
      %v1325 = vpack.c.b16 %v1204, %v1203
      %v1326 = vpack.c.b16 %v1206, %v1205
      %v1327 = vpack.c.b16 %v1208, %v1207
      %v1328 = vpack.c.b16 %v1210, %v1209
      %v1329 = vpack.c.b16 %v1212, %v1211
      %v1330 = vpack.c.b16 %v1214, %v1213
      %v1331 = vpack.c.b16 %v1216, %v1215
      %v1332 = vpack.c.b16 %v1218, %v1217
      %v1333 = vpack.c.b16 %v1220, %v1219
      %v1334 = vpack.c.b16 %v1222, %v1221
      %v1335 = vpack.c.b16 %v1224, %v1223
      %v1336 = vpack.c.b16 %v1226, %v1225
      %v1337 = vpack.c.b16 %v1228, %v1227
      %v1338 = vpack.c.b16 %v1230, %v1229
      %v1339 = vpack.c.b16 %v1232, %v1231
      %v1340 = vpack.c.b16 %v1234, %v1233
      %v1341 = vpack.c.b16 %v1236, %v1235
      %v1342 = vpack.c.b16 %v1238, %v1237
      %v1343 = vpack.c.b16 %v1240, %v1239
      %v1344 = vpack.c.b16 %v1242, %v1241
      %v1345 = vpack.c.b16 %v1244, %v1243
      %v1346 = vpack.c.b16 %v1246, %v1245
      %v1347 = vpack.c.b16 %v1248, %v1247
      %v1348 = vpack.c.b16 %v1250, %v1249
      %v1349 = vpack.c.b16 %v1252, %v1251
      %v1350 = vpack.c.b16 %v1254, %v1253
      %v1351 = vpack.c.b16 %v1256, %v1255
      %v1352 = vpack.c.b16 %v1258, %v1257
      %v1353 = vpack.c.b16 %v1260, %v1259
      %v1354 = vpack.c.b16 %v1262, %v1261
      %v1355 = vpack.c.b16 %v1264, %v1263
      %v1356 = vpack.c.b16 %v1266, %v1265
      %v1357 = vpack.c.b16 %v1268, %v1267
      %v1358 = vpack.c.b16 %v1270, %v1269
      %v1359 = vpack.c.b16 %v1272, %v1271
      %v1360 = vpack.c.b16 %v1274, %v1273
      %v1361 = vpack.c.b16 %v1276, %v1275
      %v1362 = vpack.c.b16 %v1278, %v1277
      %v1363 = vpack.c.b16 %v1280, %v1279
      %v1364 = vpack.c.b16 %v1282, %v1281
      %v1365 = vpack.c.b16 %v1284, %v1283
      %v1366 = vpack.c.b16 %v1286, %v1285
      %v1367 = vpack.c.b16 %v1288, %v1287
      %v1368 = vpack.c.b16 %v1290, %v1289
      %v1369 = vpack.c.b16 %v1292, %v1291
      %v1370 = vpack.c.b16 %v1294, %v1293
      %v1371 = vpack.c.b16 %v1296, %v1295
      %v1372 = vpack.c.b16 %v1298, %v1297
      %v1373 = vpack.c.b16 %v1300, %v1299
      %v1374 = vpack.c.b16 %v1302, %v1301
      %v1375 = vpack.c.b16 %v1304, %v1303
      %v1376 = vpack.c.b16 %v1306, %v1305
      %v1377 = vpack.c.b16 %v1308, %v1307
      %v1378 = vpack.c.b16 %v1310, %v1309
      %v1379 = vpack.c.b16 %v1312, %v1311
      %v1380 = vpack.c.b16 %v1314, %v1313
      %v1381 = vpack.c.b16 %v1316, %v1315
      %v1382 = vpack.c.b16 %v1318, %v1317
      %1447 = vmatprep.subr.bf16.mxu0 0
      %1448 = vmatpush1.bf16.msra.mxu0 %v1319
      %1449 = vmatprep.subr.bf16.mxu0 0
      %1450 = vmatpush1.bf16.msra.mxu0 %v1320
      %1451 = vmatprep.subr.bf16.mxu0 0
      %1452 = vmatpush1.bf16.msra.mxu0 %v1321
      %1453 = vmatprep.subr.bf16.mxu0 0
      %1454 = vmatpush1.bf16.msra.mxu0 %v1322
      %1455 = vmatprep.subr.bf16.mxu0 0
      %1456 = vmatpush1.bf16.msra.mxu0 %v1323
      %1457 = vmatprep.subr.bf16.mxu0 0
      %1458 = vmatpush1.bf16.msra.mxu0 %v1324
      %1459 = vmatprep.subr.bf16.mxu0 0
      %1460 = vmatpush1.bf16.msra.mxu0 %v1325
      %1461 = vmatprep.subr.bf16.mxu0 0
      %1462 = vmatpush1.bf16.msra.mxu0 %v1326
      %1463 = vmatprep.subr.bf16.mxu0 0
      %1464 = vmatpush1.bf16.msra.mxu0 %v1327
      %1465 = vmatprep.subr.bf16.mxu0 0
      %1466 = vmatpush1.bf16.msra.mxu0 %v1328
      %1467 = vmatprep.subr.bf16.mxu0 0
      %1468 = vmatpush1.bf16.msra.mxu0 %v1329
      %1469 = vmatprep.subr.bf16.mxu0 0
      %1470 = vmatpush1.bf16.msra.mxu0 %v1330
      %1471 = vmatprep.subr.bf16.mxu0 0
      %1472 = vmatpush1.bf16.msra.mxu0 %v1331
      %1473 = vmatprep.subr.bf16.mxu0 0
      %1474 = vmatpush1.bf16.msra.mxu0 %v1332
      %1475 = vmatprep.subr.bf16.mxu0 0
      %1476 = vmatpush1.bf16.msra.mxu0 %v1333
      %1477 = vmatprep.subr.bf16.mxu0 0
      %1478 = vmatpush1.bf16.msra.mxu0 %v1334
      %1479 = vmatprep.mubr.bf16.mxu0 %v928
      %1480 = vmatmul.mubr.bf16.gmra.mrb[0].mxu0 %v927
      %v1481 = vpop.f32.mrb[0].mxu0
      %v1482 = vadd.f32 0.0, %v1481
      %v1483 = vpop.f32.mrb[0].mxu0
      %v1484 = vpop.f32.mrb[0].mxu0
      %v1485 = vpop.f32.mrb[0].mxu0
      %1486 = vdwg.mxu0
      %1487 = vmatprep.subr.bf16.mxu0 0
      %1488 = vmatpush1.bf16.msra.mxu0 %v1335
      %1489 = vmatprep.subr.bf16.mxu0 0
      %1490 = vmatpush1.bf16.msra.mxu0 %v1336
      %1491 = vmatprep.subr.bf16.mxu0 0
      %1492 = vmatpush1.bf16.msra.mxu0 %v1337
      %1493 = vmatprep.subr.bf16.mxu0 0
      %1494 = vmatpush1.bf16.msra.mxu0 %v1338
      %1495 = vmatprep.subr.bf16.mxu0 0
      %1496 = vmatpush1.bf16.msra.mxu0 %v1339
      %1497 = vmatprep.subr.bf16.mxu0 0
      %1498 = vmatpush1.bf16.msra.mxu0 %v1340
      %1499 = vmatprep.subr.bf16.mxu0 0
      %1500 = vmatpush1.bf16.msra.mxu0 %v1341
      %1501 = vmatprep.subr.bf16.mxu0 0
      %1502 = vmatpush1.bf16.msra.mxu0 %v1342
      %1503 = vmatprep.subr.bf16.mxu0 0
      %1504 = vmatpush1.bf16.msra.mxu0 %v1343
      %1505 = vmatprep.subr.bf16.mxu0 0
      %1506 = vmatpush1.bf16.msra.mxu0 %v1344
      %1507 = vmatprep.subr.bf16.mxu0 0
      %1508 = vmatpush1.bf16.msra.mxu0 %v1345
      %1509 = vmatprep.subr.bf16.mxu0 0
      %1510 = vmatpush1.bf16.msra.mxu0 %v1346
      %1511 = vmatprep.subr.bf16.mxu0 0
      %1512 = vmatpush1.bf16.msra.mxu0 %v1347
      %1513 = vmatprep.subr.bf16.mxu0 0
      %1514 = vmatpush1.bf16.msra.mxu0 %v1348
      %1515 = vmatprep.subr.bf16.mxu0 0
      %1516 = vmatpush1.bf16.msra.mxu0 %v1349
      %1517 = vmatprep.subr.bf16.mxu0 0
      %1518 = vmatpush1.bf16.msra.mxu0 %v1350
      %1519 = vmatprep.mubr.bf16.mxu0 %v930
      %1520 = vmatmul.mubr.bf16.gmra.mrb[0].mxu0 %v929
      %v1521 = vpop.f32.mrb[0].mxu0
      %v1522 = vadd.f32 %v1482, %v1521
      %v1523 = vpop.f32.mrb[0].mxu0
      %v1524 = vpop.f32.mrb[0].mxu0
      %v1525 = vpop.f32.mrb[0].mxu0
      %1526 = vdwg.mxu0
      %1527 = vmatprep.subr.bf16.mxu0 0
      %1528 = vmatpush1.bf16.msra.mxu0 %v1351
      %1529 = vmatprep.subr.bf16.mxu0 0
      %1530 = vmatpush1.bf16.msra.mxu0 %v1352
      %1531 = vmatprep.subr.bf16.mxu0 0
      %1532 = vmatpush1.bf16.msra.mxu0 %v1353
      %1533 = vmatprep.subr.bf16.mxu0 0
      %1534 = vmatpush1.bf16.msra.mxu0 %v1354
      %1535 = vmatprep.subr.bf16.mxu0 0
      %1536 = vmatpush1.bf16.msra.mxu0 %v1355
      %1537 = vmatprep.subr.bf16.mxu0 0
      %1538 = vmatpush1.bf16.msra.mxu0 %v1356
      %1539 = vmatprep.subr.bf16.mxu0 0
      %1540 = vmatpush1.bf16.msra.mxu0 %v1357
      %1541 = vmatprep.subr.bf16.mxu0 0
      %1542 = vmatpush1.bf16.msra.mxu0 %v1358
      %1543 = vmatprep.subr.bf16.mxu0 0
      %1544 = vmatpush1.bf16.msra.mxu0 %v1359
      %1545 = vmatprep.subr.bf16.mxu0 0
      %1546 = vmatpush1.bf16.msra.mxu0 %v1360
      %1547 = vmatprep.subr.bf16.mxu0 0
      %1548 = vmatpush1.bf16.msra.mxu0 %v1361
      %1549 = vmatprep.subr.bf16.mxu0 0
      %1550 = vmatpush1.bf16.msra.mxu0 %v1362
      %1551 = vmatprep.subr.bf16.mxu0 0
      %1552 = vmatpush1.bf16.msra.mxu0 %v1363
      %1553 = vmatprep.subr.bf16.mxu0 0
      %1554 = vmatpush1.bf16.msra.mxu0 %v1364
      %1555 = vmatprep.subr.bf16.mxu0 0
      %1556 = vmatpush1.bf16.msra.mxu0 %v1365
      %1557 = vmatprep.subr.bf16.mxu0 0
      %1558 = vmatpush1.bf16.msra.mxu0 %v1366
      %1559 = vmatprep.mubr.bf16.mxu0 %v932
      %1560 = vmatmul.mubr.bf16.gmra.mrb[0].mxu0 %v931
      %v1561 = vpop.f32.mrb[0].mxu0
      %v1562 = vadd.f32 %v1522, %v1561
      %v1563 = vpop.f32.mrb[0].mxu0
      %v1564 = vpop.f32.mrb[0].mxu0
      %v1565 = vpop.f32.mrb[0].mxu0
      %1566 = vdwg.mxu0
      %1567 = vmatprep.subr.bf16.mxu0 0
      %1568 = vmatpush1.bf16.msra.mxu0 %v1367
      %1569 = vmatprep.subr.bf16.mxu0 0
      %1570 = vmatpush1.bf16.msra.mxu0 %v1368
      %1571 = vmatprep.subr.bf16.mxu0 0
      %1572 = vmatpush1.bf16.msra.mxu0 %v1369
      %1573 = vmatprep.subr.bf16.mxu0 0
      %1574 = vmatpush1.bf16.msra.mxu0 %v1370
      %1575 = vmatprep.subr.bf16.mxu0 0
      %1576 = vmatpush1.bf16.msra.mxu0 %v1371
      %1577 = vmatprep.subr.bf16.mxu0 0
      %1578 = vmatpush1.bf16.msra.mxu0 %v1372
      %1579 = vmatprep.subr.bf16.mxu0 0
      %1580 = vmatpush1.bf16.msra.mxu0 %v1373
      %1581 = vmatprep.subr.bf16.mxu0 0
      %1582 = vmatpush1.bf16.msra.mxu0 %v1374
      %1583 = vmatprep.subr.bf16.mxu0 0
      %1584 = vmatpush1.bf16.msra.mxu0 %v1375
      %1585 = vmatprep.subr.bf16.mxu0 0
      %1586 = vmatpush1.bf16.msra.mxu0 %v1376
      %1587 = vmatprep.subr.bf16.mxu0 0
      %1588 = vmatpush1.bf16.msra.mxu0 %v1377
      %1589 = vmatprep.subr.bf16.mxu0 0
      %1590 = vmatpush1.bf16.msra.mxu0 %v1378
      %1591 = vmatprep.subr.bf16.mxu0 0
      %1592 = vmatpush1.bf16.msra.mxu0 %v1379
      %1593 = vmatprep.subr.bf16.mxu0 0
      %1594 = vmatpush1.bf16.msra.mxu0 %v1380
      %1595 = vmatprep.subr.bf16.mxu0 0
      %1596 = vmatpush1.bf16.msra.mxu0 %v1381
      %1597 = vmatprep.subr.bf16.mxu0 0
      %1598 = vmatpush1.bf16.msra.mxu0 %v1382
      %1599 = vmatprep.mubr.bf16.mxu0 %v934
      %1600 = vmatmul.mubr.bf16.gmra.mrb[0].mxu0 %v933
      %v1601 = vpop.f32.mrb[0].mxu0
      %v1602 = vadd.f32 %v1562, %v1601
      %v1603 = vpop.f32.mrb[0].mxu0
      %v1604 = vpop.f32.mrb[0].mxu0
      %v1605 = vpop.f32.mrb[0].mxu0
      %1606 = vdwg.mxu0
      %v1607 = vld [vmem:[%s5] sm:$0x1]
      %v1608 = vld [vmem:[%s6] sm:$0x1]
      %v1609 = vrot.slane %v1602, 4
      %v1610 = vadd.f32 %v1602, %v1609
      %v1611 = vrot.slane %v1610, 2
      %v1612 = vadd.f32 %v1610, %v1611
      %v1613 = vrot.slane %v1612, 1
      %v1614 = vadd.f32 %v1612, %v1613
      %v1615 = vmul.f32 %v1614, 0.125
      %v1616 = vsub.f32 %v1602, %v1615
      %v1617 = vmul.f32 %v1616, %v1616
      %v1618 = vrot.slane %v1617, 4
      %v1619 = vadd.f32 %v1617, %v1618
      %v1620 = vrot.slane %v1619, 2
      %v1621 = vadd.f32 %v1619, %v1620
      %v1622 = vrot.slane %v1621, 1
      %v1623 = vadd.f32 %v1621, %v1622
      %v1624 = vmul.f32 %v1623, 0.125
      %v1625 = vadd.f32 %v1624, 1e-05
      %v1626 = vrsqrt.pop %v1625
      %v1627 = vmul.f32 %v1616, %v1626
      %v1629 = vlaneseq
      %v1630 = vshrl.u32 %v1629, 7
      %v1631 = vsub.s32 0, %v1630
      %v1632 = vrot.slane %v1607, %v1631
      %v1634 = vmul.f32 %v1627, %v1632
      %v1636 = vlaneseq
      %v1637 = vshrl.u32 %v1636, 7
      %v1638 = vsub.s32 0, %v1637
      %v1639 = vrot.slane %v1608, %v1638
      %v1641 = vadd.f32 %v1634, %v1639
      %vm1642 = vcmp.gt.f32.partialorder %v1641, 0.0
      %v1643 = vmul.f32 %v1641, 0.1
      %v1644 = vsel %vm1642, %v1641, %v1643
      %1645 = vst [vmem:[%s7] sm:$0xff] %v1644
    $region45: #{encoder_forward.1} parent=1 // pred_fallthru
      _
    // Predicated region
    $region46: #{encoder_forward.1} parent=1 // pred_check
      _
    $region47: #{encoder_forward.1} parent=1 // pred_check_branch
      %1647 = sbr.rel (0) target = $region49
    $region48: #{encoder_forward.1} parent=1 // pred_region
      _
    $region49: #{encoder_forward.1} parent=1 // pred_fallthru
      _
    // Predicated region
    $region50: #{encoder_forward.1} parent=1 // pred_check
      _
    $region51: #{encoder_forward.1} parent=1 // pred_check_branch
      %1649 = sbr.rel (0) target = $region53
    $region52: #{encoder_forward.1} parent=1 // pred_region
      _
    $region53: #{encoder_forward.1} parent=1 // pred_fallthru
      _
    %1650 = vsyncpa [#allocation4], 1
    %1651 = vsyncpa [#allocation6], 1

</llo_original>
